<compile_context>
chip_gen: v7x
topology: tpu7x:2x2x1
jax: 0.10.0
libtpu: 0.0.40
codegen_flags: <defaults>
</compile_context>

<pallas_src>
import jax
import jax.numpy as jnp
from jax.experimental import pallas as pl
from jax.experimental.pallas import tpu as pltpu

GDEP = 2     # config.graph_layer_num
EMBED = 32   # config.local_embed_dim


def hypergraph_conv_kernel(x_ref, a_ref, ag_ref, wdg_ref, wgg_ref, wsm_ref,
                           bout_ref, o_ref):
    X = x_ref[0]          # (M, TD)  lane-dense activations for this grid step
    A = a_ref[0]          # (M, M)   normalized data adjacency (block-diag if fused)
    Ag = ag_ref[0]        # (M, M)   normalized geo adjacency
    TD = X.shape[-1]

    # Gate contribution of X (constant across layers): one matmul with
    # kron(I_T, (W[:, D:] + W_g[:, D:]).T).  Independent of the A-prop chain.
    gate_x = jnp.dot(X, wsm_ref[GDEP], preferred_element_type=jnp.float32)

    # Cheap serial A-power chains: P_i = A^i @ X, G_i = Ag^i @ X (small M x M).
    p = X
    g = X
    props_d = []
    props_g = []
    for _ in range(GDEP):
        p = jnp.dot(A, p, preferred_element_type=jnp.float32)
        g = jnp.dot(Ag, g, preferred_element_type=jnp.float32)
        props_d.append(p)
        props_g.append(g)

    # Per-layer wide matmuls: all LHS's are mutually independent; value + gate
    # are fused into one (M, TD) @ (TD, 2*TD) product per branch.
    out_acc = jnp.zeros_like(X)
    for i in range(GDEP):
        dv = jnp.dot(props_d[i], wdg_ref[i], preferred_element_type=jnp.float32)
        gv = jnp.dot(props_g[i], wgg_ref[i], preferred_element_type=jnp.float32)
        x_data, gate_d = dv[:, :TD], dv[:, TD:]      # static, 256-lane aligned split
        x_geo, gate_g = gv[:, :TD], gv[:, TD:]
        V = jax.nn.sigmoid(gate_d + gate_g + gate_x)
        x_fused = V * x_data + (1.0 - V) * x_geo
        # out_linear applied to the concat == sum of per-layer projections.
        out_acc = out_acc + jnp.dot(x_fused, wsm_ref[i],
                                    preferred_element_type=jnp.float32)

    # Lane-dense (M, 256) store -> unmasked vst; bias broadcasts over rows.
    o_ref[0] = out_acc + bout_ref[...]


def _single_tensorcore_chip():
    """True for v5e/v6e-class single-TensorCore chips (fuse the batch there)."""
    try:
        kind = jax.devices()[0].device_kind.lower()
    except Exception:
        return False
    return any(s in kind for s in
               ("v5e", "v5 lite", "v5lite", "v6e", "v6 lite", "v6lite"))


def hypergraph_conv(X, H_data, H_geo, params, fuse_batch=None):
    """X: (B, T, N, D), H_data: (B, N, E), H_geo: (N, Eg).  `params` are the raw
    PyTorch-shaped module parameters."""
    Bb, T, N, D = X.shape
    TD = T * D
    conv_w, conv_wg, W_w, Wg_w, out_w, out_b = params
    if fuse_batch is None:
        fuse_batch = _single_tensorcore_chip()   # v7x: keep one batch elem per TC

    # ------------- layout: lane-dense (B, N, T*D) activations ----------------
    X_nt = jnp.transpose(X, (0, 2, 1, 3)).reshape(Bb, N, TD)

    # ------------- hoisted normalized adjacencies (wrapper-side XLA) ----------
    Dn = jnp.sum(H_data, axis=-1, keepdims=True)
    Dn_inv = jnp.where(Dn > 0, 1.0 / (Dn + 1e-8), jnp.zeros_like(Dn))
    Bn = jnp.sum(H_data, axis=1, keepdims=True)
    Bn_inv = jnp.where(Bn > 0, 1.0 / (Bn + 1e-8), jnp.zeros_like(Bn))
    A = jnp.matmul(Dn_inv * H_data, jnp.swapaxes(Bn_inv * H_data, 1, 2))  # (B,N,N)

    Dg = jnp.sum(H_geo, axis=-1, keepdims=True)
    Dg_inv = jnp.where(Dg > 0, 1.0 / (Dg + 1e-8), jnp.zeros_like(Dg))
    Bg = jnp.sum(H_geo, axis=0, keepdims=True)
    Bg_inv = jnp.where(Bg > 0, 1.0 / (Bg + 1e-8), jnp.zeros_like(Bg))
    Ag = (Dg_inv * H_geo) @ (Bg_inv * H_geo).T                            # (N,N)

    # ------------- wrapper-side weight composition ----------------------------
    eyeT = jnp.eye(T, dtype=jnp.float32)

    def kron_t(w_dd):                          # right-multiply (D,D) -> (TD,TD)
        return jnp.kron(eyeT, w_dd)

    wa_dd = W_w[:, :D].T                       # gate weight on x_data
    wga_dd = Wg_w[:, :D].T                     # gate weight on x_geo
    wxs_dd = (W_w[:, D:] + Wg_w[:, D:]).T      # fused gate weight on X

    # Cumulative conv products: x_data_i = (A^{i+1} X) @ (conv_w[0] .. conv_w[i]).
    kc, kg = [], []
    cc = jnp.eye(D, dtype=jnp.float32)
    cg = jnp.eye(D, dtype=jnp.float32)
    for i in range(GDEP):
        cc = cc @ conv_w[i]
        cg = cg @ conv_wg[i]
        kc.append(cc)
        kg.append(cg)

    # Value | gate folded: one (TD, 2*TD) weight per layer per branch.
    wdg = jnp.stack([jnp.concatenate([kron_t(kc[i]), kron_t(kc[i] @ wa_dd)], -1)
                     for i in range(GDEP)])                      # (GDEP, TD, 2TD)
    wgg = jnp.stack([jnp.concatenate([kron_t(kg[i]), kron_t(kg[i] @ wga_dd)], -1)
                     for i in range(GDEP)])                      # (GDEP, TD, 2TD)
    # Packed square weights: out_linear per-layer slabs + fused X-gate weight.
    wsm = jnp.stack([kron_t(out_w[:, i * D:(i + 1) * D].T) for i in range(GDEP)]
                    + [kron_t(wxs_dd)])                          # (GDEP+1, TD, TD)
    bout = jnp.tile(out_b, (T,)).reshape(1, TD)

    # ------------- grid packing: per-batch (v7x) vs. batch-fused (v5e/v6e) ----
    if fuse_batch:
        G, M = 1, Bb * N
        Xg = X_nt.reshape(1, M, TD)
        A_blk = jnp.zeros((M, M), jnp.float32)
        for b in range(Bb):                    # block-diag of the per-batch A's
            A_blk = A_blk.at[b * N:(b + 1) * N, b * N:(b + 1) * N].set(A[b])
        A_g = A_blk.reshape(1, M, M)
        Ag_g = jnp.kron(jnp.eye(Bb, dtype=jnp.float32), Ag).reshape(1, M, M)
    else:
        G, M = Bb, N
        Xg = X_nt
        A_g = A
        Ag_g = jnp.tile(Ag[None], (Bb, 1, 1))

    out_nt = pl.pallas_call(
        hypergraph_conv_kernel,
        out_shape=jax.ShapeDtypeStruct((G, M, TD), jnp.float32),
        grid_spec=pltpu.PrefetchScalarGridSpec(
            num_scalar_prefetch=0,
            grid=(G,),
            in_specs=[
                pl.BlockSpec((1, M, TD), lambda i: (i, 0, 0)),          # X (lane-dense)
                pl.BlockSpec((1, M, M), lambda i: (i, 0, 0)),           # A_norm (hoisted)
                pl.BlockSpec((1, M, M), lambda i: (i, 0, 0)),           # A_geo_norm
                pl.BlockSpec((GDEP, TD, 2 * TD), lambda i: (0, 0, 0)),  # value|gate, data
                pl.BlockSpec((GDEP, TD, 2 * TD), lambda i: (0, 0, 0)),  # value|gate, geo
                pl.BlockSpec((GDEP + 1, TD, TD), lambda i: (0, 0, 0)),  # out slabs + X-gate
                pl.BlockSpec((1, TD), lambda i: (0, 0)),                # tiled out bias
            ],
            out_specs=pl.BlockSpec((1, M, TD), lambda i: (i, 0, 0)),
        ),
        compiler_params=pltpu.CompilerParams(
            dimension_semantics=("parallel",)),
    )(Xg, A_g, Ag_g, wdg, wgg, wsm, bout)

    # Back to the PyTorch (B, T, N, D) convention — pure layout plumbing.
    return jnp.transpose(out_nt.reshape(Bb, N, T, D), (0, 2, 1, 3))


def ref_forward(X, H_data, H_geo, raw):
    """Pure-JAX mirror of the PyTorch forward (ground truth)."""
    conv_w, conv_wg, W_w, Wg_w, out_w, out_b = raw
    D = jnp.sum(H_data, axis=-1, keepdims=True)
    D_inv = jnp.where(D > 0, 1.0 / (D + 1e-8), jnp.zeros_like(D))
    Bm = jnp.sum(H_data, axis=1, keepdims=True)
    B_inv = jnp.where(Bm > 0, 1.0 / (Bm + 1e-8), jnp.zeros_like(Bm))
    A_norm = jnp.matmul(D_inv * H_data, jnp.transpose(B_inv * H_data, (0, 2, 1)))
    Dg = jnp.sum(H_geo, axis=-1, keepdims=True)
    Dg_inv = jnp.where(Dg > 0, 1.0 / (Dg + 1e-8), jnp.zeros_like(Dg))
    Bg = jnp.sum(H_geo, axis=0, keepdims=True)
    Bg_inv = jnp.where(Bg > 0, 1.0 / (Bg + 1e-8), jnp.zeros_like(Bg))
    A_geo = (Dg_inv * H_geo) @ (Bg_inv * H_geo).T
    outs = []
    x_data = X
    x_geo = X
    for i in range(GDEP):
        x_data = jnp.einsum('btnd,bmn->btmd', x_data, A_norm) @ conv_w[i]
        x_geo = jnp.einsum('btnd,mn->btmd', x_geo, A_geo) @ conv_wg[i]
        V = jax.nn.sigmoid(jnp.concatenate([x_data, X], -1) @ W_w.T +
                           jnp.concatenate([x_geo, X], -1) @ Wg_w.T)
        outs.append(V * x_data + (1.0 - V) * x_geo)
    out = jnp.concatenate(outs, -1)
    return out @ out_w.T + out_b


if __name__ == "__main__":
    Bb, T, N, D = 2, 8, 16, EMBED
    E, Eg = 16, 16

    key = jax.random.PRNGKey(0)
    keys = jax.random.split(key, 10)

    X = jax.random.normal(keys[0], (Bb, T, N, D), dtype=jnp.float32)
    H_data = (jax.random.uniform(keys[1], (Bb, N, E)) < 0.3).astype(jnp.float32)
    H_geo = (jax.random.uniform(keys[2], (N, Eg)) < 0.3).astype(jnp.float32)

    # Deterministic "module" parameters (PyTorch param shapes):
    conv_w = 0.1 * jax.random.normal(keys[3], (GDEP, D, D), dtype=jnp.float32)   # conv_W[i].weight
    conv_wg = 0.1 * jax.random.normal(keys[4], (GDEP, D, D), dtype=jnp.float32)  # conv_W_g[i].weight
    W_w = 0.1 * jax.random.normal(keys[5], (D, 2 * D), dtype=jnp.float32)        # W.weight
    Wg_w = 0.1 * jax.random.normal(keys[6], (D, 2 * D), dtype=jnp.float32)       # W_g.weight
    out_w = 0.1 * jax.random.normal(keys[7], (D, GDEP * D), dtype=jnp.float32)   # out_linear.weight
    out_b = 0.1 * jax.random.normal(keys[8], (D,), dtype=jnp.float32)            # out_linear.bias
    # NOTE: conv_W[i].bias exists in the torch module but is unused by forward.

    raw = (conv_w, conv_wg, W_w, Wg_w, out_w, out_b)

    expected = jax.block_until_ready(ref_forward(X, H_data, H_geo, raw))

    # Exercise both grid packings (per-batch grid for v7x, batch-fused for
    # single-TC v5e/v6e); both run on any TPU, only perf differs.
    for fuse in (False, True):
        out = jax.block_until_ready(
            hypergraph_conv(X, H_data, H_geo, raw, fuse_batch=fuse))
        assert out.shape == (Bb, T, N, D)
        assert jnp.allclose(out, expected, atol=1e-4, rtol=1e-4), (
            fuse, float(jnp.max(jnp.abs(out - expected))))

    print("KERNEL_OK")
</pallas_src>

<mosaic_0001>
module attributes {stable_mosaic.version = 11 : i64} {
  func.func @hypergraph_conv_kernel(%arg0: i32, %arg1: memref<1x16x256xf32, #tpu.memory_space<vmem>>, %arg2: memref<1x16x16xf32, #tpu.memory_space<vmem>>, %arg3: memref<1x16x16xf32, #tpu.memory_space<vmem>>, %arg4: memref<2x256x512xf32, #tpu.memory_space<vmem>>, %arg5: memref<2x256x512xf32, #tpu.memory_space<vmem>>, %arg6: memref<3x256x256xf32, #tpu.memory_space<vmem>>, %arg7: memref<1x256xf32, #tpu.memory_space<vmem>>, %arg8: memref<1x16x256xf32, #tpu.memory_space<vmem>>) attributes {dimension_semantics = [#tpu.dimension_semantics<parallel>], iteration_bounds = array<i64: 2>, scalar_prefetch = 0 : i64, scratch_operands = 0 : i64, tpu.core_type = #tpu.core_type<tc>, window_params = [{transform_indices = @transform_0, window_bounds = array<i64: 1, 16, 256>}, {transform_indices = @transform_1, window_bounds = array<i64: 1, 16, 16>}, {transform_indices = @transform_2, window_bounds = array<i64: 1, 16, 16>}, {pipeline_mode = #tpu.pipeline_mode<synchronous>, transform_indices = @transform_3, window_bounds = array<i64: 2, 256, 512>}, {pipeline_mode = #tpu.pipeline_mode<synchronous>, transform_indices = @transform_4, window_bounds = array<i64: 2, 256, 512>}, {pipeline_mode = #tpu.pipeline_mode<synchronous>, transform_indices = @transform_5, window_bounds = array<i64: 3, 256, 256>}, {pipeline_mode = #tpu.pipeline_mode<synchronous>, transform_indices = @transform_6, window_bounds = array<i64: 1, 256>}, {transform_indices = @transform_7, window_bounds = array<i64: 1, 16, 256>}]} {
    %c0 = arith.constant 0 : index
    %c0_0 = arith.constant 0 : index
    %c0_1 = arith.constant 0 : index
    %0 = vector.load %arg1[%c0, %c0_0, %c0_1] : memref<1x16x256xf32, #tpu.memory_space<vmem>>, vector<1x16x256xf32>
    %1 = vector.shape_cast %0 : vector<1x16x256xf32> to vector<16x256xf32>
    %c0_2 = arith.constant 0 : index
    %c0_3 = arith.constant 0 : index
    %c0_4 = arith.constant 0 : index
    %2 = vector.load %arg2[%c0_2, %c0_3, %c0_4] : memref<1x16x16xf32, #tpu.memory_space<vmem>>, vector<1x16x16xf32>
    %3 = vector.shape_cast %2 : vector<1x16x16xf32> to vector<16x16xf32>
    %c0_5 = arith.constant 0 : index
    %c0_6 = arith.constant 0 : index
    %c0_7 = arith.constant 0 : index
    %4 = vector.load %arg3[%c0_5, %c0_6, %c0_7] : memref<1x16x16xf32, #tpu.memory_space<vmem>>, vector<1x16x16xf32>
    %5 = vector.shape_cast %4 : vector<1x16x16xf32> to vector<16x16xf32>
    %c2 = arith.constant 2 : index
    %c0_8 = arith.constant 0 : index
    %c0_9 = arith.constant 0 : index
    %6 = vector.load %arg6[%c2, %c0_8, %c0_9] : memref<3x256x256xf32, #tpu.memory_space<vmem>>, vector<1x256x256xf32>
    %7 = vector.shape_cast %6 : vector<1x256x256xf32> to vector<256x256xf32>
    %cst = arith.constant dense<0.000000e+00> : vector<16x256xf32>
    %8 = tpu.matmul %1, %7, %cst {dimension_numbers = #tpu.dot_dimension_numbers<[1], [0], [0], [1], [0, 0, 1, 1], [], []>} : vector<16x256xf32>, vector<256x256xf32>, vector<16x256xf32> -> vector<16x256xf32>
    %cst_10 = arith.constant dense<0.000000e+00> : vector<16x256xf32>
    %9 = tpu.matmul %3, %1, %cst_10 {dimension_numbers = #tpu.dot_dimension_numbers<[1], [0], [0], [1], [0, 0, 1, 1], [], []>} : vector<16x16xf32>, vector<16x256xf32>, vector<16x256xf32> -> vector<16x256xf32>
    %cst_11 = arith.constant dense<0.000000e+00> : vector<16x256xf32>
    %10 = tpu.matmul %5, %1, %cst_11 {dimension_numbers = #tpu.dot_dimension_numbers<[1], [0], [0], [1], [0, 0, 1, 1], [], []>} : vector<16x16xf32>, vector<16x256xf32>, vector<16x256xf32> -> vector<16x256xf32>
    %cst_12 = arith.constant dense<0.000000e+00> : vector<16x256xf32>
    %11 = tpu.matmul %3, %9, %cst_12 {dimension_numbers = #tpu.dot_dimension_numbers<[1], [0], [0], [1], [0, 0, 1, 1], [], []>} : vector<16x16xf32>, vector<16x256xf32>, vector<16x256xf32> -> vector<16x256xf32>
    %cst_13 = arith.constant dense<0.000000e+00> : vector<16x256xf32>
    %12 = tpu.matmul %5, %10, %cst_13 {dimension_numbers = #tpu.dot_dimension_numbers<[1], [0], [0], [1], [0, 0, 1, 1], [], []>} : vector<16x16xf32>, vector<16x256xf32>, vector<16x256xf32> -> vector<16x256xf32>
    %cst_14 = arith.constant 0.000000e+00 : f32
    %13 = vector.broadcast %cst_14 : f32 to vector<16x256xf32>
    %c0_15 = arith.constant 0 : index
    %c0_16 = arith.constant 0 : index
    %c0_17 = arith.constant 0 : index
    %14 = vector.load %arg4[%c0_15, %c0_16, %c0_17] : memref<2x256x512xf32, #tpu.memory_space<vmem>>, vector<1x256x512xf32>
    %15 = vector.shape_cast %14 : vector<1x256x512xf32> to vector<256x512xf32>
    %cst_18 = arith.constant dense<0.000000e+00> : vector<16x512xf32>
    %16 = tpu.matmul %9, %15, %cst_18 {dimension_numbers = #tpu.dot_dimension_numbers<[1], [0], [0], [1], [0, 0, 1, 1], [], []>} : vector<16x256xf32>, vector<256x512xf32>, vector<16x512xf32> -> vector<16x512xf32>
    %c0_19 = arith.constant 0 : index
    %c0_20 = arith.constant 0 : index
    %c0_21 = arith.constant 0 : index
    %17 = vector.load %arg5[%c0_19, %c0_20, %c0_21] : memref<2x256x512xf32, #tpu.memory_space<vmem>>, vector<1x256x512xf32>
    %18 = vector.shape_cast %17 : vector<1x256x512xf32> to vector<256x512xf32>
    %cst_22 = arith.constant dense<0.000000e+00> : vector<16x512xf32>
    %19 = tpu.matmul %10, %18, %cst_22 {dimension_numbers = #tpu.dot_dimension_numbers<[1], [0], [0], [1], [0, 0, 1, 1], [], []>} : vector<16x256xf32>, vector<256x512xf32>, vector<16x512xf32> -> vector<16x512xf32>
    %20 = vector.extract_strided_slice %16 {offsets = [0, 0], sizes = [16, 256], strides = [1, 1]} : vector<16x512xf32> to vector<16x256xf32>
    %21 = vector.extract_strided_slice %16 {offsets = [0, 256], sizes = [16, 256], strides = [1, 1]} : vector<16x512xf32> to vector<16x256xf32>
    %22 = vector.extract_strided_slice %19 {offsets = [0, 0], sizes = [16, 256], strides = [1, 1]} : vector<16x512xf32> to vector<16x256xf32>
    %23 = vector.extract_strided_slice %19 {offsets = [0, 256], sizes = [16, 256], strides = [1, 1]} : vector<16x512xf32> to vector<16x256xf32>
    %24 = arith.addf %21, %23 : vector<16x256xf32>
    %25 = arith.addf %24, %8 : vector<16x256xf32>
    %26 = arith.negf %25 : vector<16x256xf32>
    %27 = math.exp %26 : vector<16x256xf32>
    %cst_23 = arith.constant 1.000000e+00 : f32
    %28 = vector.broadcast %cst_23 : f32 to vector<16x256xf32>
    %29 = arith.addf %28, %27 : vector<16x256xf32>
    %30 = arith.divf %28, %29 : vector<16x256xf32>
    %31 = arith.mulf %30, %20 : vector<16x256xf32>
    %cst_24 = arith.constant 1.000000e+00 : f32
    %32 = vector.broadcast %cst_24 : f32 to vector<16x256xf32>
    %33 = arith.subf %32, %30 : vector<16x256xf32>
    %34 = arith.mulf %33, %22 : vector<16x256xf32>
    %35 = arith.addf %31, %34 : vector<16x256xf32>
    %c0_25 = arith.constant 0 : index
    %c0_26 = arith.constant 0 : index
    %c0_27 = arith.constant 0 : index
    %36 = vector.load %arg6[%c0_25, %c0_26, %c0_27] : memref<3x256x256xf32, #tpu.memory_space<vmem>>, vector<1x256x256xf32>
    %37 = vector.shape_cast %36 : vector<1x256x256xf32> to vector<256x256xf32>
    %cst_28 = arith.constant dense<0.000000e+00> : vector<16x256xf32>
    %38 = tpu.matmul %35, %37, %cst_28 {dimension_numbers = #tpu.dot_dimension_numbers<[1], [0], [0], [1], [0, 0, 1, 1], [], []>} : vector<16x256xf32>, vector<256x256xf32>, vector<16x256xf32> -> vector<16x256xf32>
    %39 = arith.addf %13, %38 : vector<16x256xf32>
    %c1 = arith.constant 1 : index
    %c0_29 = arith.constant 0 : index
    %c0_30 = arith.constant 0 : index
    %40 = vector.load %arg4[%c1, %c0_29, %c0_30] : memref<2x256x512xf32, #tpu.memory_space<vmem>>, vector<1x256x512xf32>
    %41 = vector.shape_cast %40 : vector<1x256x512xf32> to vector<256x512xf32>
    %cst_31 = arith.constant dense<0.000000e+00> : vector<16x512xf32>
    %42 = tpu.matmul %11, %41, %cst_31 {dimension_numbers = #tpu.dot_dimension_numbers<[1], [0], [0], [1], [0, 0, 1, 1], [], []>} : vector<16x256xf32>, vector<256x512xf32>, vector<16x512xf32> -> vector<16x512xf32>
    %c1_32 = arith.constant 1 : index
    %c0_33 = arith.constant 0 : index
    %c0_34 = arith.constant 0 : index
    %43 = vector.load %arg5[%c1_32, %c0_33, %c0_34] : memref<2x256x512xf32, #tpu.memory_space<vmem>>, vector<1x256x512xf32>
    %44 = vector.shape_cast %43 : vector<1x256x512xf32> to vector<256x512xf32>
    %cst_35 = arith.constant dense<0.000000e+00> : vector<16x512xf32>
    %45 = tpu.matmul %12, %44, %cst_35 {dimension_numbers = #tpu.dot_dimension_numbers<[1], [0], [0], [1], [0, 0, 1, 1], [], []>} : vector<16x256xf32>, vector<256x512xf32>, vector<16x512xf32> -> vector<16x512xf32>
    %46 = vector.extract_strided_slice %42 {offsets = [0, 0], sizes = [16, 256], strides = [1, 1]} : vector<16x512xf32> to vector<16x256xf32>
    %47 = vector.extract_strided_slice %42 {offsets = [0, 256], sizes = [16, 256], strides = [1, 1]} : vector<16x512xf32> to vector<16x256xf32>
    %48 = vector.extract_strided_slice %45 {offsets = [0, 0], sizes = [16, 256], strides = [1, 1]} : vector<16x512xf32> to vector<16x256xf32>
    %49 = vector.extract_strided_slice %45 {offsets = [0, 256], sizes = [16, 256], strides = [1, 1]} : vector<16x512xf32> to vector<16x256xf32>
    %50 = arith.addf %47, %49 : vector<16x256xf32>
    %51 = arith.addf %50, %8 : vector<16x256xf32>
    %52 = arith.negf %51 : vector<16x256xf32>
    %53 = math.exp %52 : vector<16x256xf32>
    %cst_36 = arith.constant 1.000000e+00 : f32
    %54 = vector.broadcast %cst_36 : f32 to vector<16x256xf32>
    %55 = arith.addf %54, %53 : vector<16x256xf32>
    %56 = arith.divf %54, %55 : vector<16x256xf32>
    %57 = arith.mulf %56, %46 : vector<16x256xf32>
    %cst_37 = arith.constant 1.000000e+00 : f32
    %58 = vector.broadcast %cst_37 : f32 to vector<16x256xf32>
    %59 = arith.subf %58, %56 : vector<16x256xf32>
    %60 = arith.mulf %59, %48 : vector<16x256xf32>
    %61 = arith.addf %57, %60 : vector<16x256xf32>
    %c1_38 = arith.constant 1 : index
    %c0_39 = arith.constant 0 : index
    %c0_40 = arith.constant 0 : index
    %62 = vector.load %arg6[%c1_38, %c0_39, %c0_40] : memref<3x256x256xf32, #tpu.memory_space<vmem>>, vector<1x256x256xf32>
    %63 = vector.shape_cast %62 : vector<1x256x256xf32> to vector<256x256xf32>
    %cst_41 = arith.constant dense<0.000000e+00> : vector<16x256xf32>
    %64 = tpu.matmul %61, %63, %cst_41 {dimension_numbers = #tpu.dot_dimension_numbers<[1], [0], [0], [1], [0, 0, 1, 1], [], []>} : vector<16x256xf32>, vector<256x256xf32>, vector<16x256xf32> -> vector<16x256xf32>
    %65 = arith.addf %39, %64 : vector<16x256xf32>
    %c0_42 = arith.constant 0 : index
    %c0_43 = arith.constant 0 : index
    %66 = vector.load %arg7[%c0_42, %c0_43] : memref<1x256xf32, #tpu.memory_space<vmem>>, vector<1x256xf32>
    %67 = vector.broadcast %66 : vector<1x256xf32> to vector<16x256xf32>
    %68 = arith.addf %65, %67 : vector<16x256xf32>
    %c0_44 = arith.constant 0 : index
    %c0_45 = arith.constant 0 : index
    %c0_46 = arith.constant 0 : index
    %69 = vector.load %arg8[%c0_44, %c0_45, %c0_46] : memref<1x16x256xf32, #tpu.memory_space<vmem>>, vector<1x16x256xf32>
    %70 = vector.shape_cast %69 : vector<1x16x256xf32> to vector<16x256xf32>
    %71 = vector.shape_cast %68 : vector<16x256xf32> to vector<1x16x256xf32>
    tpu.vector_store %arg8[%c0_44, %c0_45, %c0_46], %71 {strides = array<i32>} : memref<1x16x256xf32, #tpu.memory_space<vmem>>, vector<1x16x256xf32>,
    return
  }
  func.func @transform_0(%arg0: i32) -> (i32, i32, i32) {
    %c0_i32 = arith.constant 0 : i32
    %c0_i32_0 = arith.constant 0 : i32
    %c0_i32_1 = arith.constant 0 : i32
    return %arg0, %c0_i32, %c0_i32_0 : i32, i32, i32
  }
  func.func @transform_1(%arg0: i32) -> (i32, i32, i32) {
    %c0_i32 = arith.constant 0 : i32
    %c0_i32_0 = arith.constant 0 : i32
    %c0_i32_1 = arith.constant 0 : i32
    return %arg0, %c0_i32, %c0_i32_0 : i32, i32, i32
  }
  func.func @transform_2(%arg0: i32) -> (i32, i32, i32) {
    %c0_i32 = arith.constant 0 : i32
    %c0_i32_0 = arith.constant 0 : i32
    %c0_i32_1 = arith.constant 0 : i32
    return %arg0, %c0_i32, %c0_i32_0 : i32, i32, i32
  }
  func.func @transform_3(%arg0: i32) -> (i32, i32, i32) {
    %c0_i32 = arith.constant 0 : i32
    %c0_i32_0 = arith.constant 0 : i32
    %c0_i32_1 = arith.constant 0 : i32
    %c0_i32_2 = arith.constant 0 : i32
    return %c0_i32, %c0_i32_0, %c0_i32_1 : i32, i32, i32
  }
  func.func @transform_4(%arg0: i32) -> (i32, i32, i32) {
    %c0_i32 = arith.constant 0 : i32
    %c0_i32_0 = arith.constant 0 : i32
    %c0_i32_1 = arith.constant 0 : i32
    %c0_i32_2 = arith.constant 0 : i32
    return %c0_i32, %c0_i32_0, %c0_i32_1 : i32, i32, i32
  }
  func.func @transform_5(%arg0: i32) -> (i32, i32, i32) {
    %c0_i32 = arith.constant 0 : i32
    %c0_i32_0 = arith.constant 0 : i32
    %c0_i32_1 = arith.constant 0 : i32
    %c0_i32_2 = arith.constant 0 : i32
    return %c0_i32, %c0_i32_0, %c0_i32_1 : i32, i32, i32
  }
  func.func @transform_6(%arg0: i32) -> (i32, i32) {
    %c0_i32 = arith.constant 0 : i32
    %c0_i32_0 = arith.constant 0 : i32
    %c0_i32_1 = arith.constant 0 : i32
    return %c0_i32, %c0_i32_0 : i32, i32
  }
  func.func @transform_7(%arg0: i32) -> (i32, i32, i32) {
    %c0_i32 = arith.constant 0 : i32
    %c0_i32_0 = arith.constant 0 : i32
    %c0_i32_1 = arith.constant 0 : i32
    return %arg0, %c0_i32, %c0_i32_0 : i32, i32, i32
  }
}

</mosaic_0001>

<llo_original>
// kernel: tpu_custom_call.1
$region0: #{tpu_custom_call.1}
  #allocation0 [shape = 'u32[]', space=smem, size = 0x4, offset = 0x4, fixed_abs, tag = 'smem constant byte address 0x4 - core index']
  #allocation1 [shape = 'u32[144,128]{1,0:T(1,128)}', space=vmem, size = 0x12000, scoped, tag = 'internal scratch']
  %s0 = inlined_call_operand.hbm [shape: f32[2,16,256], index: 0, kind: input, shape index: {}]
  %s1 = inlined_call_operand.hbm [shape: f32[2,16,16], index: 1, kind: input, shape index: {}]
  %s2 = inlined_call_operand.hbm [shape: f32[2,16,16], index: 2, kind: input, shape index: {}]
  %s3 = inlined_call_operand.hbm [shape: f32[2,256,512], index: 3, kind: input, shape index: {}]
  %s4 = inlined_call_operand.hbm [shape: f32[2,256,512], index: 4, kind: input, shape index: {}]
  %s5 = inlined_call_operand.hbm [shape: f32[3,256,256], index: 5, kind: input, shape index: {}]
  %s6 = inlined_call_operand.vmem [shape: f32[1,256], index: 6, kind: input, shape index: {}]
  %s7 = inlined_call_operand.hbm [shape: f32[2,16,256], index: 7, kind: output, shape index: {}]
  %s8 = sld [smem:[#allocation0]]
  $region85: #{tpu_custom_call.1} parent=0
    _
  %s10 = ssub.s32 1, %s8
  %s11 = scalar_select 0, %s10, %s8
  $region1: #{tpu_custom_call.1} parent=0
    #allocation2 [shape = 'u8[32768]{0}', space=vmem, size = 0x8000, scoped, tag = 'input window, operand 0']
    #allocation3 [shape = 's32[2]{0}', space=sflag, size = 0x8, scoped, tag = 'scoped memory for tpu_custom_call.1']
    #allocation4 [shape = 's32[2]{0}', space=sflag, size = 0x8, scoped, tag = 'scoped memory for tpu_custom_call.1']
    #allocation5 [shape = 'u8[16384]{0}', space=vmem, size = 0x4000, scoped, tag = 'input window, operand 1']
    #allocation6 [shape = 's32[2]{0}', space=sflag, size = 0x8, scoped, tag = 'scoped memory for tpu_custom_call.1']
    #allocation7 [shape = 'u8[16384]{0}', space=vmem, size = 0x4000, scoped, tag = 'input window, operand 2']
    #allocation8 [shape = 'u8[1048576]{0}', space=vmem, size = 0x100000, scoped, tag = 'input window, operand 3, single buffered']
    #allocation9 [shape = 's32[1]{0}', space=sflag, size = 0x4, scoped, tag = 'scoped memory for tpu_custom_call.1']
    #allocation10 [shape = 'u8[1048576]{0}', space=vmem, size = 0x100000, scoped, tag = 'input window, operand 4, single buffered']
    #allocation11 [shape = 'u8[786432]{0}', space=vmem, size = 0xc0000, scoped, tag = 'input window, operand 5, single buffered']
    #allocation12 [shape = 's32[1]{0}', space=sflag, size = 0x4, scoped, tag = 'scoped memory for tpu_custom_call.1']
    #allocation13 [shape = 'u8[32768]{0}', space=vmem, size = 0x8000, scoped, tag = 'output window, operand 0']
    %12 = vsyncpa [#allocation3], 0
    %s13 = scalar_lea.sflag [#allocation3], 1
    %14 = vsyncpa %s13, 0
    %15 = vsyncpa [#allocation6], 0
    %s16 = scalar_lea.sflag [#allocation6], 1
    %17 = vsyncpa %s16, 0
    %18 = vsyncpa [#allocation9], 0
    %19 = vsyncpa [#allocation12], 0
    %20 = vsyncpa [#allocation4], 0
    %s21 = scalar_lea.sflag [#allocation4], 1
    %22 = vsyncpa %s21, 0
    loop: start=0, step=1, limit=4
    $region2: #{tpu_custom_call.1} parent=1 // loop_pre_header
      _
    $region3: #{tpu_custom_call.1} parent=1 // loop_header
      %s24 = sphi 0, %s28
      %p25 = scmp.ge.s32.totalorder %s24, 4
      %s34 = sphi 0, %s36
      %s37 = sphi 0, %s34
      %s38 = sphi 0, %s37
      %s54 = sphi 0, %s38
      %s60 = sphi 0, %s62
      %s63 = sphi 0, %s60
      %s64 = sphi 0, %s63
      %s80 = sphi 0, %s64
      %s86 = sphi 0, %s88
      %s89 = sphi 0, %s86
      %s90 = sphi 0, %s89
      %s106 = sphi 0, %s90
      %s110 = sphi 0, %s110
      %s112 = sphi 0, %s110
      %s113 = sphi 0, %s112
      %s127 = sphi 0, %s113
      %s131 = sphi 0, %s131
      %s133 = sphi 0, %s131
      %s134 = sphi 0, %s133
      %s148 = sphi 0, %s134
      %s152 = sphi 0, %s152
      %s154 = sphi 0, %s152
      %s155 = sphi 0, %s154
      %s169 = sphi 0, %s155
      %s173 = sphi 0, %s173
      %s175 = sphi 0, %s173
      %s176 = sphi 0, %s175
      %s190 = sphi 0, %s176
      %s196 = sphi 0, %s198
      %s199 = sphi 0, %s196
      %s200 = sphi 0, %s199
      %s216 = sphi 0, %s200
    $region4: #{tpu_custom_call.1} parent=1 // loop_header_branch
      %27 = sbr.rel (%p25) target = $region8
    $region5: #{tpu_custom_call.1} parent=1 // loop_body
      %s29 = ssub.s32 %s24, 1
      %s30 = ssub.s32 %s24, 2
      %s31 = sadd.s32 %s24, 1
      %s32 = ssub.s32 %s24, %s31
      %p33 = scmp.eq.s32.totalorder %s32, 0
      %s35 = sadd.s32 %s34, 1
      %s36 = scalar_select %p33, %s34, %s35
      %p39 = pneg %p33
      %p40 = scmp.eq.s32.totalorder %s24, 1
      %p41 = por %p39, %p40
      %p42 = scmp.ne.s32.totalorder %s34, %s37
      %p43 = scmp.eq.s32.totalorder %s24, 0
      %p44 = por %p42, %p43
      %p45 = scmp.ne.s32.totalorder %s34, %s37
      %p46 = scmp.eq.s32.totalorder %s29, 1
      %p47 = por %p45, %p46
      %p48 = scmp.ne.s32.totalorder %s37, %s38
      %p49 = scmp.eq.s32.totalorder %s29, 0
      %p50 = por %p48, %p49
      %p51 = scmp.ne.s32.totalorder %s37, %s38
      %p52 = scmp.eq.s32.totalorder %s30, 1
      %p53 = por %p51, %p52
      %p55 = scmp.ne.s32.totalorder %s38, %s54
      %p56 = scmp.eq.s32.totalorder %s30, 0
      %p57 = por %p55, %p56
      %s58 = ssub.s32 %s24, %s31
      %p59 = scmp.eq.s32.totalorder %s58, 0
      %s61 = sadd.s32 %s60, 1
      %s62 = scalar_select %p59, %s60, %s61
      %p65 = pneg %p59
      %p66 = scmp.eq.s32.totalorder %s24, 1
      %p67 = por %p65, %p66
      %p68 = scmp.ne.s32.totalorder %s60, %s63
      %p69 = scmp.eq.s32.totalorder %s24, 0
      %p70 = por %p68, %p69
      %p71 = scmp.ne.s32.totalorder %s60, %s63
      %p72 = scmp.eq.s32.totalorder %s29, 1
      %p73 = por %p71, %p72
      %p74 = scmp.ne.s32.totalorder %s63, %s64
      %p75 = scmp.eq.s32.totalorder %s29, 0
      %p76 = por %p74, %p75
      %p77 = scmp.ne.s32.totalorder %s63, %s64
      %p78 = scmp.eq.s32.totalorder %s30, 1
      %p79 = por %p77, %p78
      %p81 = scmp.ne.s32.totalorder %s64, %s80
      %p82 = scmp.eq.s32.totalorder %s30, 0
      %p83 = por %p81, %p82
      %s84 = ssub.s32 %s24, %s31
      %p85 = scmp.eq.s32.totalorder %s84, 0
      %s87 = sadd.s32 %s86, 1
      %s88 = scalar_select %p85, %s86, %s87
      %p91 = pneg %p85
      %p92 = scmp.eq.s32.totalorder %s24, 1
      %p93 = por %p91, %p92
      %p94 = scmp.ne.s32.totalorder %s86, %s89
      %p95 = scmp.eq.s32.totalorder %s24, 0
      %p96 = por %p94, %p95
      %p97 = scmp.ne.s32.totalorder %s86, %s89
      %p98 = scmp.eq.s32.totalorder %s29, 1
      %p99 = por %p97, %p98
      %p100 = scmp.ne.s32.totalorder %s89, %s90
      %p101 = scmp.eq.s32.totalorder %s29, 0
      %p102 = por %p100, %p101
      %p103 = scmp.ne.s32.totalorder %s89, %s90
      %p104 = scmp.eq.s32.totalorder %s30, 1
      %p105 = por %p103, %p104
      %p107 = scmp.ne.s32.totalorder %s90, %s106
      %p108 = scmp.eq.s32.totalorder %s30, 0
      %p109 = por %p107, %p108
      %s111 = sadd.s32 %s110, 1
      %p114 = scmp.eq.s32.totalorder %s24, 1
      %p115 = scmp.ne.s32.totalorder %s110, %s112
      %p116 = scmp.eq.s32.totalorder %s24, 0
      %p117 = por %p115, %p116
      %p118 = scmp.ne.s32.totalorder %s110, %s112
      %p119 = scmp.eq.s32.totalorder %s29, 1
      %p120 = por %p118, %p119
      %p121 = scmp.ne.s32.totalorder %s112, %s113
      %p122 = scmp.eq.s32.totalorder %s29, 0
      %p123 = por %p121, %p122
      %p124 = scmp.ne.s32.totalorder %s112, %s113
      %p125 = scmp.eq.s32.totalorder %s30, 1
      %p126 = por %p124, %p125
      %p128 = scmp.ne.s32.totalorder %s113, %s127
      %p129 = scmp.eq.s32.totalorder %s30, 0
      %p130 = por %p128, %p129
      %s132 = sadd.s32 %s131, 1
      %p135 = scmp.eq.s32.totalorder %s24, 1
      %p136 = scmp.ne.s32.totalorder %s131, %s133
      %p137 = scmp.eq.s32.totalorder %s24, 0
      %p138 = por %p136, %p137
      %p139 = scmp.ne.s32.totalorder %s131, %s133
      %p140 = scmp.eq.s32.totalorder %s29, 1
      %p141 = por %p139, %p140
      %p142 = scmp.ne.s32.totalorder %s133, %s134
      %p143 = scmp.eq.s32.totalorder %s29, 0
      %p144 = por %p142, %p143
      %p145 = scmp.ne.s32.totalorder %s133, %s134
      %p146 = scmp.eq.s32.totalorder %s30, 1
      %p147 = por %p145, %p146
      %p149 = scmp.ne.s32.totalorder %s134, %s148
      %p150 = scmp.eq.s32.totalorder %s30, 0
      %p151 = por %p149, %p150
      %s153 = sadd.s32 %s152, 1
      %p156 = scmp.eq.s32.totalorder %s24, 1
      %p157 = scmp.ne.s32.totalorder %s152, %s154
      %p158 = scmp.eq.s32.totalorder %s24, 0
      %p159 = por %p157, %p158
      %p160 = scmp.ne.s32.totalorder %s152, %s154
      %p161 = scmp.eq.s32.totalorder %s29, 1
      %p162 = por %p160, %p161
      %p163 = scmp.ne.s32.totalorder %s154, %s155
      %p164 = scmp.eq.s32.totalorder %s29, 0
      %p165 = por %p163, %p164
      %p166 = scmp.ne.s32.totalorder %s154, %s155
      %p167 = scmp.eq.s32.totalorder %s30, 1
      %p168 = por %p166, %p167
      %p170 = scmp.ne.s32.totalorder %s155, %s169
      %p171 = scmp.eq.s32.totalorder %s30, 0
      %p172 = por %p170, %p171
      %s174 = sadd.s32 %s173, 1
      %p177 = scmp.eq.s32.totalorder %s24, 1
      %p178 = scmp.ne.s32.totalorder %s173, %s175
      %p179 = scmp.eq.s32.totalorder %s24, 0
      %p180 = por %p178, %p179
      %p181 = scmp.ne.s32.totalorder %s173, %s175
      %p182 = scmp.eq.s32.totalorder %s29, 1
      %p183 = por %p181, %p182
      %p184 = scmp.ne.s32.totalorder %s175, %s176
      %p185 = scmp.eq.s32.totalorder %s29, 0
      %p186 = por %p184, %p185
      %p187 = scmp.ne.s32.totalorder %s175, %s176
      %p188 = scmp.eq.s32.totalorder %s30, 1
      %p189 = por %p187, %p188
      %p191 = scmp.ne.s32.totalorder %s176, %s190
      %p192 = scmp.eq.s32.totalorder %s30, 0
      %p193 = por %p191, %p192
      %s194 = ssub.s32 %s24, %s31
      %p195 = scmp.eq.s32.totalorder %s194, 0
      %s197 = sadd.s32 %s196, 1
      %s198 = scalar_select %p195, %s196, %s197
      %p201 = pneg %p195
      %p202 = scmp.eq.s32.totalorder %s24, 1
      %p203 = por %p201, %p202
      %p204 = scmp.ne.s32.totalorder %s196, %s199
      %p205 = scmp.eq.s32.totalorder %s24, 0
      %p206 = por %p204, %p205
      %p207 = scmp.ne.s32.totalorder %s196, %s199
      %p208 = scmp.eq.s32.totalorder %s29, 1
      %p209 = por %p207, %p208
      %p210 = scmp.ne.s32.totalorder %s199, %s200
      %p211 = scmp.eq.s32.totalorder %s29, 0
      %p212 = por %p210, %p211
      %p213 = scmp.ne.s32.totalorder %s199, %s200
      %p214 = scmp.eq.s32.totalorder %s30, 1
      %p215 = por %p213, %p214
      %p217 = scmp.ne.s32.totalorder %s200, %s216
      %p218 = scmp.eq.s32.totalorder %s30, 0
      %p219 = por %p217, %p218
      %p220 = scmp.le.s32.totalorder 1, %s24
      %p221 = scmp.lt.s32.totalorder %s24, 3
      %p222 = pnand %p220, %p221
      %p223 = pneg %p222
      // Predicated region
      $region9: #{tpu_custom_call.1} parent=5 // pred_check
        _
      $region10: #{tpu_custom_call.1} parent=5 // pred_check_branch
        %225 = sbr.rel (%p222) target = $region12
      $region11: #{tpu_custom_call.1} parent=5 // pred_region
        %s226 = ssub.s32 %s24, 1
        // Predicated region
        $region13: #{tpu_custom_call.1} parent=11 // pred_check
          %p227 = pneg %p123
        $region14: #{tpu_custom_call.1} parent=11 // pred_check_branch
          %229 = sbr.rel (%p227) target = $region16
        $region15: #{tpu_custom_call.1} parent=11 // pred_region
          %s231 = ssub.s32 32768, 32768
          %232 = vsyncadd [#allocation9], %s231
          %s233 = sshll.u32 [#allocation8], 4
          %s234 = int_to_ptr.vmem [resolvable:$true] %s233
          %239 = dma.hbm_to_vmem [thread:$0]  %s3, 32768, %s234, [#allocation9], 512, 512, 32
        $region16: #{tpu_custom_call.1} parent=11 // pred_fallthru
          _
        // Predicated region
        $region17: #{tpu_custom_call.1} parent=11 // pred_check
          %p240 = pneg %p144
        $region18: #{tpu_custom_call.1} parent=11 // pred_check_branch
          %242 = sbr.rel (%p240) target = $region20
        $region19: #{tpu_custom_call.1} parent=11 // pred_region
          %s244 = ssub.s32 32768, 32768
          %245 = vsyncadd [#allocation9], %s244
          %s246 = sshll.u32 [#allocation10], 4
          %s247 = int_to_ptr.vmem [resolvable:$true] %s246
          %252 = dma.hbm_to_vmem [thread:$0]  %s4, 32768, %s247, [#allocation9], 512, 512, 32
        $region20: #{tpu_custom_call.1} parent=11 // pred_fallthru
          _
        // Predicated region
        $region21: #{tpu_custom_call.1} parent=11 // pred_check
          %p253 = pneg %p165
        $region22: #{tpu_custom_call.1} parent=11 // pred_check_branch
          %255 = sbr.rel (%p253) target = $region24
        $region23: #{tpu_custom_call.1} parent=11 // pred_region
          %s257 = ssub.s32 24576, 24576
          %258 = vsyncadd [#allocation12], %s257
          %s259 = sshll.u32 [#allocation11], 4
          %s260 = int_to_ptr.vmem [resolvable:$true] %s259
          %265 = dma.hbm_to_vmem [thread:$0]  %s5, 24576, %s260, [#allocation12], 256, 256, 16
        $region24: #{tpu_custom_call.1} parent=11 // pred_fallthru
          _
        // Predicated region
        $region25: #{tpu_custom_call.1} parent=11 // pred_check
          %p266 = pneg %p186
        $region26: #{tpu_custom_call.1} parent=11 // pred_check_branch
          %268 = sbr.rel (%p266) target = $region28
        $region27: #{tpu_custom_call.1} parent=11 // pred_region
          _
        $region28: #{tpu_custom_call.1} parent=11 // pred_fallthru
          _
      $region12: #{tpu_custom_call.1} parent=5 // pred_fallthru
        _
      %p269 = scmp.lt.s32.totalorder %s24, 2
      // Predicated region
      $region29: #{tpu_custom_call.1} parent=5 // pred_check
        %p270 = pneg %p269
      $region30: #{tpu_custom_call.1} parent=5 // pred_check_branch
        %272 = sbr.rel (%p270) target = $region32
      $region31: #{tpu_custom_call.1} parent=5 // pred_region
        // Predicated region
        $region33: #{tpu_custom_call.1} parent=31 // pred_check
          %p273 = pneg %p44
        $region34: #{tpu_custom_call.1} parent=31 // pred_check_branch
          %275 = sbr.rel (%p273) target = $region36
        $region35: #{tpu_custom_call.1} parent=31 // pred_region
          %s276 = sand.u32 %s34, 1
          %s277 = scalar_lea.sflag [#allocation3], %s276
          %s278 = sand.u32 %s34, 1
          %s279 = smul.addr %s278, 32
          %s280 = scalar_lea.vmem [#allocation2], %s279
          %s282 = ssub.s32 512, 512
          %283 = vsyncadd %s277, %s282
          %s284 = smul.addr %s24, 4
          %s285 = smul.addr %s284, 128
          %s286 = scalar_lea.hbm %s0, %s285
          %s287 = sshll.u32 %s280, 4
          %s288 = int_to_ptr.vmem [resolvable:$true] %s287
          %293 = dma.hbm_to_vmem [thread:$0]  %s286, 512, %s288, %s277, 256, 256, 16
        $region36: #{tpu_custom_call.1} parent=31 // pred_fallthru
          _
        // Predicated region
        $region37: #{tpu_custom_call.1} parent=31 // pred_check
          %p294 = pneg %p70
        $region38: #{tpu_custom_call.1} parent=31 // pred_check_branch
          %296 = sbr.rel (%p294) target = $region40
        $region39: #{tpu_custom_call.1} parent=31 // pred_region
          %s297 = sand.u32 %s24, 1
          %s298 = scalar_lea.sflag [#allocation6], %s297
          %s299 = sand.u32 %s60, 1
          %s300 = smul.addr %s299, 16
          %s301 = scalar_lea.vmem [#allocation5], %s300
          %s303 = ssub.s32 256, 256
          %304 = vsyncadd %s298, %s303
          %s305 = smul.addr %s24, 2
          %s306 = smul.addr %s305, 128
          %s307 = scalar_lea.hbm %s1, %s306
          %s308 = sshll.u32 %s301, 4
          %s309 = int_to_ptr.vmem [resolvable:$true] %s308
          %314 = dma.hbm_to_vmem [thread:$0]  %s307, 256, %s309, %s298, 128, 128, 8
        $region40: #{tpu_custom_call.1} parent=31 // pred_fallthru
          _
        // Predicated region
        $region41: #{tpu_custom_call.1} parent=31 // pred_check
          %p315 = pneg %p96
        $region42: #{tpu_custom_call.1} parent=31 // pred_check_branch
          %317 = sbr.rel (%p315) target = $region44
        $region43: #{tpu_custom_call.1} parent=31 // pred_region
          %s318 = sand.u32 %s24, 1
          %s319 = scalar_lea.sflag [#allocation6], %s318
          %s320 = sand.u32 %s86, 1
          %s321 = smul.addr %s320, 16
          %s322 = scalar_lea.vmem [#allocation7], %s321
          %s324 = ssub.s32 256, 256
          %325 = vsyncadd %s319, %s324
          %s326 = smul.addr %s24, 2
          %s327 = smul.addr %s326, 128
          %s328 = scalar_lea.hbm %s2, %s327
          %s329 = sshll.u32 %s322, 4
          %s330 = int_to_ptr.vmem [resolvable:$true] %s329
          %335 = dma.hbm_to_vmem [thread:$0]  %s328, 256, %s330, %s319, 128, 128, 8
        $region44: #{tpu_custom_call.1} parent=31 // pred_fallthru
          _
      $region32: #{tpu_custom_call.1} parent=5 // pred_fallthru
        _
      %p336 = scmp.le.s32.totalorder 1, %s24
      %p337 = scmp.lt.s32.totalorder %s24, 3
      %p338 = pnand %p336, %p337
      %p339 = pneg %p338
      // Predicated region
      $region45: #{tpu_custom_call.1} parent=5 // pred_check
        _
      $region46: #{tpu_custom_call.1} parent=5 // pred_check_branch
        %341 = sbr.rel (%p338) target = $region48
      $region47: #{tpu_custom_call.1} parent=5 // pred_region
        %s342 = ssub.s32 %s24, 1
        %s343 = sand.u32 %s37, 1
        %s344 = scalar_lea.sflag [#allocation3], %s343
        %s345 = sand.u32 %s37, 1
        %s346 = smul.addr %s345, 32
        %s347 = scalar_lea.vmem [#allocation2], %s346
        // Predicated region
        $region49: #{tpu_custom_call.1} parent=47 // pred_check
          %p348 = pneg %p50
        $region50: #{tpu_custom_call.1} parent=47 // pred_check_branch
          %350 = sbr.rel (%p348) target = $region52
        $region51: #{tpu_custom_call.1} parent=47 // pred_region
          %351 = dma.done %s344, 512
        $region52: #{tpu_custom_call.1} parent=47 // pred_fallthru
          _
        %s352 = sand.u32 %s29, 1
        %s353 = scalar_lea.sflag [#allocation6], %s352
        %s354 = sand.u32 %s63, 1
        %s355 = smul.addr %s354, 16
        %s356 = scalar_lea.vmem [#allocation5], %s355
        // Predicated region
        $region53: #{tpu_custom_call.1} parent=47 // pred_check
          %p357 = pneg %p76
        $region54: #{tpu_custom_call.1} parent=47 // pred_check_branch
          %359 = sbr.rel (%p357) target = $region56
        $region55: #{tpu_custom_call.1} parent=47 // pred_region
          %360 = dma.done %s353, 256
        $region56: #{tpu_custom_call.1} parent=47 // pred_fallthru
          _
        %s361 = sand.u32 %s29, 1
        %s362 = scalar_lea.sflag [#allocation6], %s361
        %s363 = sand.u32 %s89, 1
        %s364 = smul.addr %s363, 16
        %s365 = scalar_lea.vmem [#allocation7], %s364
        // Predicated region
        $region57: #{tpu_custom_call.1} parent=47 // pred_check
          %p366 = pneg %p102
        $region58: #{tpu_custom_call.1} parent=47 // pred_check_branch
          %368 = sbr.rel (%p366) target = $region60
        $region59: #{tpu_custom_call.1} parent=47 // pred_region
          %369 = dma.done %s362, 256
        $region60: #{tpu_custom_call.1} parent=47 // pred_fallthru
          _
        // Predicated region
        $region61: #{tpu_custom_call.1} parent=47 // pred_check
          %p370 = pneg %p123
        $region62: #{tpu_custom_call.1} parent=47 // pred_check_branch
          %372 = sbr.rel (%p370) target = $region64
        $region63: #{tpu_custom_call.1} parent=47 // pred_region
          %373 = dma.done [#allocation9], 32768
        $region64: #{tpu_custom_call.1} parent=47 // pred_fallthru
          _
        // Predicated region
        $region65: #{tpu_custom_call.1} parent=47 // pred_check
          %p374 = pneg %p144
        $region66: #{tpu_custom_call.1} parent=47 // pred_check_branch
          %376 = sbr.rel (%p374) target = $region68
        $region67: #{tpu_custom_call.1} parent=47 // pred_region
          %377 = dma.done [#allocation9], 32768
        $region68: #{tpu_custom_call.1} parent=47 // pred_fallthru
          _
        // Predicated region
        $region69: #{tpu_custom_call.1} parent=47 // pred_check
          %p378 = pneg %p165
        $region70: #{tpu_custom_call.1} parent=47 // pred_check_branch
          %380 = sbr.rel (%p378) target = $region72
        $region71: #{tpu_custom_call.1} parent=47 // pred_region
          %381 = dma.done [#allocation12], 24576
        $region72: #{tpu_custom_call.1} parent=47 // pred_fallthru
          _
        %s382 = sand.u32 %s37, 1
        %s383 = scalar_lea.sflag [#allocation3], %s382
        %s384 = sand.u32 %s37, 1
        %s385 = smul.addr %s384, 32
        %s386 = scalar_lea.vmem [#allocation2], %s385
        %p387 = pneg %p50
        %p388 = pneg %p47
        %s389 = sand.u32 %s29, 1
        %s390 = scalar_lea.sflag [#allocation6], %s389
        %s391 = sand.u32 %s63, 1
        %s392 = smul.addr %s391, 16
        %s393 = scalar_lea.vmem [#allocation5], %s392
        %p394 = pneg %p76
        %p395 = pneg %p73
        %s396 = sand.u32 %s29, 1
        %s397 = scalar_lea.sflag [#allocation6], %s396
        %s398 = sand.u32 %s89, 1
        %s399 = smul.addr %s398, 16
        %s400 = scalar_lea.vmem [#allocation7], %s399
        %p401 = pneg %p102
        %p402 = pneg %p99
        %p403 = pneg %p123
        %p404 = pneg %p120
        %p405 = pneg %p144
        %p406 = pneg %p141
        %p407 = pneg %p165
        %p408 = pneg %p162
        %p409 = pneg %p186
        %p410 = pneg %p183
        %p411 = pneg %p212
        %p412 = pneg %p209
        %s413 = sand.u32 %s199, 1
        %s414 = scalar_lea.sflag [#allocation4], %s413
        %s415 = sand.u32 %s199, 1
        %s416 = smul.addr %s415, 32
        %s417 = scalar_lea.vmem [#allocation13], %s416
        %v418 = vld [vmem:[%s347] sm:$0xff]
        %v419 = vld [vmem:[%s347 + $0x8] sm:$0xff]
        %v420 = vld [vmem:[%s347 + $0x10] sm:$0xff]
        %v421 = vld [vmem:[%s347 + $0x18] sm:$0xff]
        %v422 = vld [vmem:[%s356] sm:$0xff]
        %v423 = vld [vmem:[%s356 + $0x8] sm:$0xff]
        %v424 = vld [vmem:[%s365] sm:$0xff]
        %v425 = vld [vmem:[%s365 + $0x8] sm:$0xff]
        %s426 = scalar_lea.vmem [#allocation11], 1024
        %v427 = vld [vmem:[%s426] sm:$0xff]
        %v428 = vld [vmem:[%s426 + $0x8] sm:$0xff]
        %v429 = vld [vmem:[%s426 + $0x10] sm:$0xff]
        %v430 = vld [vmem:[%s426 + $0x18] sm:$0xff]
        %v431 = vld [vmem:[%s426 + $0x20] sm:$0xff]
        %v432 = vld [vmem:[%s426 + $0x28] sm:$0xff]
        %v433 = vld [vmem:[%s426 + $0x30] sm:$0xff]
        %v434 = vld [vmem:[%s426 + $0x38] sm:$0xff]
        %v435 = vld [vmem:[%s426 + $0x40] sm:$0xff]
        %v436 = vld [vmem:[%s426 + $0x48] sm:$0xff]
        %v437 = vld [vmem:[%s426 + $0x50] sm:$0xff]
        %v438 = vld [vmem:[%s426 + $0x58] sm:$0xff]
        %v439 = vld [vmem:[%s426 + $0x60] sm:$0xff]
        %v440 = vld [vmem:[%s426 + $0x68] sm:$0xff]
        %v441 = vld [vmem:[%s426 + $0x70] sm:$0xff]
        %v442 = vld [vmem:[%s426 + $0x78] sm:$0xff]
        %v443 = vld [vmem:[%s426 + $0x80] sm:$0xff]
        %v444 = vld [vmem:[%s426 + $0x88] sm:$0xff]
        %v445 = vld [vmem:[%s426 + $0x90] sm:$0xff]
        %v446 = vld [vmem:[%s426 + $0x98] sm:$0xff]
        %v447 = vld [vmem:[%s426 + $0xa0] sm:$0xff]
        %v448 = vld [vmem:[%s426 + $0xa8] sm:$0xff]
        %v449 = vld [vmem:[%s426 + $0xb0] sm:$0xff]
        %v450 = vld [vmem:[%s426 + $0xb8] sm:$0xff]
        %v451 = vld [vmem:[%s426 + $0xc0] sm:$0xff]
        %v452 = vld [vmem:[%s426 + $0xc8] sm:$0xff]
        %v453 = vld [vmem:[%s426 + $0xd0] sm:$0xff]
        %v454 = vld [vmem:[%s426 + $0xd8] sm:$0xff]
        %v455 = vld [vmem:[%s426 + $0xe0] sm:$0xff]
        %v456 = vld [vmem:[%s426 + $0xe8] sm:$0xff]
        %v457 = vld [vmem:[%s426 + $0xf0] sm:$0xff]
        %v458 = vld [vmem:[%s426 + $0xf8] sm:$0xff]
        %v459 = vld [vmem:[%s426 + $0x100] sm:$0xff]
        %v460 = vld [vmem:[%s426 + $0x108] sm:$0xff]
        %v461 = vld [vmem:[%s426 + $0x110] sm:$0xff]
        %v462 = vld [vmem:[%s426 + $0x118] sm:$0xff]
        %v463 = vld [vmem:[%s426 + $0x120] sm:$0xff]
        %v464 = vld [vmem:[%s426 + $0x128] sm:$0xff]
        %v465 = vld [vmem:[%s426 + $0x130] sm:$0xff]
        %v466 = vld [vmem:[%s426 + $0x138] sm:$0xff]
        %v467 = vld [vmem:[%s426 + $0x140] sm:$0xff]
        %v468 = vld [vmem:[%s426 + $0x148] sm:$0xff]
        %v469 = vld [vmem:[%s426 + $0x150] sm:$0xff]
        %v470 = vld [vmem:[%s426 + $0x158] sm:$0xff]
        %v471 = vld [vmem:[%s426 + $0x160] sm:$0xff]
        %v472 = vld [vmem:[%s426 + $0x168] sm:$0xff]
        %v473 = vld [vmem:[%s426 + $0x170] sm:$0xff]
        %v474 = vld [vmem:[%s426 + $0x178] sm:$0xff]
        %v475 = vld [vmem:[%s426 + $0x180] sm:$0xff]
        %v476 = vld [vmem:[%s426 + $0x188] sm:$0xff]
        %v477 = vld [vmem:[%s426 + $0x190] sm:$0xff]
        %v478 = vld [vmem:[%s426 + $0x198] sm:$0xff]
        %v479 = vld [vmem:[%s426 + $0x1a0] sm:$0xff]
        %v480 = vld [vmem:[%s426 + $0x1a8] sm:$0xff]
        %v481 = vld [vmem:[%s426 + $0x1b0] sm:$0xff]
        %v482 = vld [vmem:[%s426 + $0x1b8] sm:$0xff]
        %v483 = vld [vmem:[%s426 + $0x1c0] sm:$0xff]
        %v484 = vld [vmem:[%s426 + $0x1c8] sm:$0xff]
        %v485 = vld [vmem:[%s426 + $0x1d0] sm:$0xff]
        %v486 = vld [vmem:[%s426 + $0x1d8] sm:$0xff]
        %v487 = vld [vmem:[%s426 + $0x1e0] sm:$0xff]
        %v488 = vld [vmem:[%s426 + $0x1e8] sm:$0xff]
        %v489 = vld [vmem:[%s426 + $0x1f0] sm:$0xff]
        %v490 = vld [vmem:[%s426 + $0x1f8] sm:$0xff]
        %491 = vmatprep.subr.mxu0 %v428
        %492 = vmatpush1.msra.mxu0 %v427
        %493 = vmatprep.subr.mxu0 %v430
        %494 = vmatpush1.msra.mxu0 %v429
        %495 = vmatprep.subr.mxu0 %v432
        %496 = vmatpush1.msra.mxu0 %v431
        %497 = vmatprep.subr.mxu0 %v434
        %498 = vmatpush1.msra.mxu0 %v433
        %499 = vmatprep.subr.mxu0 %v436
        %500 = vmatpush1.msra.mxu0 %v435
        %501 = vmatprep.subr.mxu0 %v438
        %502 = vmatpush1.msra.mxu0 %v437
        %503 = vmatprep.subr.mxu0 %v440
        %504 = vmatpush1.msra.mxu0 %v439
        %505 = vmatprep.subr.mxu0 %v442
        %506 = vmatpush1.msra.mxu0 %v441
        %507 = vmatprep.subr.mxu0 %v444
        %508 = vmatpush1.msra.mxu0 %v443
        %509 = vmatprep.subr.mxu0 %v446
        %510 = vmatpush1.msra.mxu0 %v445
        %511 = vmatprep.subr.mxu0 %v448
        %512 = vmatpush1.msra.mxu0 %v447
        %513 = vmatprep.subr.mxu0 %v450
        %514 = vmatpush1.msra.mxu0 %v449
        %515 = vmatprep.subr.mxu0 %v452
        %516 = vmatpush1.msra.mxu0 %v451
        %517 = vmatprep.subr.mxu0 %v454
        %518 = vmatpush1.msra.mxu0 %v453
        %519 = vmatprep.subr.mxu0 %v456
        %520 = vmatpush1.msra.mxu0 %v455
        %521 = vmatprep.subr.mxu0 %v458
        %522 = vmatpush1.msra.mxu0 %v457
        %523 = vmatprep.subr.mxu0 %v460
        %524 = vmatpush1.msra.mxu0 %v459
        %525 = vmatprep.subr.mxu0 %v462
        %526 = vmatpush1.msra.mxu0 %v461
        %527 = vmatprep.subr.mxu0 %v464
        %528 = vmatpush1.msra.mxu0 %v463
        %529 = vmatprep.subr.mxu0 %v466
        %530 = vmatpush1.msra.mxu0 %v465
        %531 = vmatprep.subr.mxu0 %v468
        %532 = vmatpush1.msra.mxu0 %v467
        %533 = vmatprep.subr.mxu0 %v470
        %534 = vmatpush1.msra.mxu0 %v469
        %535 = vmatprep.subr.mxu0 %v472
        %536 = vmatpush1.msra.mxu0 %v471
        %537 = vmatprep.subr.mxu0 %v474
        %538 = vmatpush1.msra.mxu0 %v473
        %539 = vmatprep.subr.mxu0 %v476
        %540 = vmatpush1.msra.mxu0 %v475
        %541 = vmatprep.subr.mxu0 %v478
        %542 = vmatpush1.msra.mxu0 %v477
        %543 = vmatprep.subr.mxu0 %v480
        %544 = vmatpush1.msra.mxu0 %v479
        %545 = vmatprep.subr.mxu0 %v482
        %546 = vmatpush1.msra.mxu0 %v481
        %547 = vmatprep.subr.mxu0 %v484
        %548 = vmatpush1.msra.mxu0 %v483
        %549 = vmatprep.subr.mxu0 %v486
        %550 = vmatpush1.msra.mxu0 %v485
        %551 = vmatprep.subr.mxu0 %v488
        %552 = vmatpush1.msra.mxu0 %v487
        %553 = vmatprep.subr.mxu0 %v490
        %554 = vmatpush1.msra.mxu0 %v489
        %555 = vmatprep.mubr.f32.mxu0 %v419
        %556 = vmatmul.mubr.f32.gmra.mrb[0].mxu0 %v418
        %v557 = vpop.f32.mrb[0].mxu0
        %v558 = vadd.f32 0.0, %v557
        %v559 = vpop.f32.mrb[0].mxu0
        %v560 = vadd.f32 0.0, %v559
        %561 = vmatprep.mubr.f32.mxu0 %v421
        %562 = vmatmul.mubr.f32.gmra.mrb[0].mxu0 %v420
        %v563 = vpop.f32.mrb[0].mxu0
        %v564 = vadd.f32 0.0, %v563
        %v565 = vpop.f32.mrb[0].mxu0
        %v566 = vadd.f32 0.0, %v565
        %567 = vdwg.mxu0
        %vm568 = vcmask 130048
        %v570 = vsel %vm568, %v422, 0
        %v573 = vsel %vm568, %v423, 0
        %575 = vmatprep.subr.mxu0 %v419
        %576 = vmatpush1.msra.mxu0 %v418
        %577 = vmatprep.subr.mxu0 %v421
        %578 = vmatpush1.msra.mxu0 %v420
        %579 = vmatprep.subr.mxu0 0.0
        %580 = vmatpush1.msra.mxu0 0.0
        %581 = vmatprep.subr.mxu0 0.0
        %582 = vmatpush1.msra.mxu0 0.0
        %583 = vmatprep.subr.mxu0 0.0
        %584 = vmatpush1.msra.mxu0 0.0
        %585 = vmatprep.subr.mxu0 0.0
        %586 = vmatpush1.msra.mxu0 0.0
        %587 = vmatprep.subr.mxu0 0.0
        %588 = vmatpush1.msra.mxu0 0.0
        %589 = vmatprep.subr.mxu0 0.0
        %590 = vmatpush1.msra.mxu0 0.0
        %591 = vmatprep.subr.mxu0 0.0
        %592 = vmatpush1.msra.mxu0 0.0
        %593 = vmatprep.subr.mxu0 0.0
        %594 = vmatpush1.msra.mxu0 0.0
        %595 = vmatprep.subr.mxu0 0.0
        %596 = vmatpush1.msra.mxu0 0.0
        %597 = vmatprep.subr.mxu0 0.0
        %598 = vmatpush1.msra.mxu0 0.0
        %599 = vmatprep.subr.mxu0 0.0
        %600 = vmatpush1.msra.mxu0 0.0
        %601 = vmatprep.subr.mxu0 0.0
        %602 = vmatpush1.msra.mxu0 0.0
        %603 = vmatprep.subr.mxu0 0.0
        %604 = vmatpush1.msra.mxu0 0.0
        %605 = vmatprep.subr.mxu0 0.0
        %606 = vmatpush1.msra.mxu0 0.0
        %607 = vmatprep.subr.mxu0 0.0
        %608 = vmatpush1.msra.mxu0 0.0
        %609 = vmatprep.subr.mxu0 0.0
        %610 = vmatpush1.msra.mxu0 0.0
        %611 = vmatprep.subr.mxu0 0.0
        %612 = vmatpush1.msra.mxu0 0.0
        %613 = vmatprep.subr.mxu0 0.0
        %614 = vmatpush1.msra.mxu0 0.0
        %615 = vmatprep.subr.mxu0 0.0
        %616 = vmatpush1.msra.mxu0 0.0
        %617 = vmatprep.subr.mxu0 0.0
        %618 = vmatpush1.msra.mxu0 0.0
        %619 = vmatprep.subr.mxu0 0.0
        %620 = vmatpush1.msra.mxu0 0.0
        %621 = vmatprep.subr.mxu0 0.0
        %622 = vmatpush1.msra.mxu0 0.0
        %623 = vmatprep.subr.mxu0 0.0
        %624 = vmatpush1.msra.mxu0 0.0
        %625 = vmatprep.subr.mxu0 0.0
        %626 = vmatpush1.msra.mxu0 0.0
        %627 = vmatprep.subr.mxu0 0.0
        %628 = vmatpush1.msra.mxu0 0.0
        %629 = vmatprep.subr.mxu0 0.0
        %630 = vmatpush1.msra.mxu0 0.0
        %631 = vmatprep.subr.mxu0 0.0
        %632 = vmatpush1.msra.mxu0 0.0
        %633 = vmatprep.subr.mxu0 0.0
        %634 = vmatpush1.msra.mxu0 0.0
        %635 = vmatprep.subr.mxu0 0.0
        %636 = vmatpush1.msra.mxu0 0.0
        %637 = vmatprep.subr.mxu0 0.0
        %638 = vmatpush1.msra.mxu0 0.0
        %639 = vmatprep.mubr.f32.mxu0 0.0
        %640 = vmatmul.mubr.f32.gmra.mrb[0].mxu0 %v570
        %v641 = vpop.f32.mrb[0].mxu0
        %v642 = vadd.f32 0.0, %v641
        %v643 = vpop.f32.mrb[0].mxu0
        %v644 = vadd.f32 0.0, %v643
        %645 = vmatprep.mubr.f32.mxu0 0.0
        %646 = vmatmul.mubr.f32.gmra.mrb[0].mxu0 %v573
        %v647 = vpop.f32.mrb[0].mxu0
        %v648 = vadd.f32 0.0, %v647
        %v649 = vpop.f32.mrb[0].mxu0
        %v650 = vadd.f32 0.0, %v649
        %651 = vdwg.mxu0
        %v653 = vsel %vm568, %v424, 0
        %v656 = vsel %vm568, %v425, 0
        %658 = vmatprep.subr.mxu0 %v419
        %659 = vmatpush1.msra.mxu0 %v418
        %660 = vmatprep.subr.mxu0 %v421
        %661 = vmatpush1.msra.mxu0 %v420
        %662 = vmatprep.subr.mxu0 0.0
        %663 = vmatpush1.msra.mxu0 0.0
        %664 = vmatprep.subr.mxu0 0.0
        %665 = vmatpush1.msra.mxu0 0.0
        %666 = vmatprep.subr.mxu0 0.0
        %667 = vmatpush1.msra.mxu0 0.0
        %668 = vmatprep.subr.mxu0 0.0
        %669 = vmatpush1.msra.mxu0 0.0
        %670 = vmatprep.subr.mxu0 0.0
        %671 = vmatpush1.msra.mxu0 0.0
        %672 = vmatprep.subr.mxu0 0.0
        %673 = vmatpush1.msra.mxu0 0.0
        %674 = vmatprep.subr.mxu0 0.0
        %675 = vmatpush1.msra.mxu0 0.0
        %676 = vmatprep.subr.mxu0 0.0
        %677 = vmatpush1.msra.mxu0 0.0
        %678 = vmatprep.subr.mxu0 0.0
        %679 = vmatpush1.msra.mxu0 0.0
        %680 = vmatprep.subr.mxu0 0.0
        %681 = vmatpush1.msra.mxu0 0.0
        %682 = vmatprep.subr.mxu0 0.0
        %683 = vmatpush1.msra.mxu0 0.0
        %684 = vmatprep.subr.mxu0 0.0
        %685 = vmatpush1.msra.mxu0 0.0
        %686 = vmatprep.subr.mxu0 0.0
        %687 = vmatpush1.msra.mxu0 0.0
        %688 = vmatprep.subr.mxu0 0.0
        %689 = vmatpush1.msra.mxu0 0.0
        %690 = vmatprep.subr.mxu0 0.0
        %691 = vmatpush1.msra.mxu0 0.0
        %692 = vmatprep.subr.mxu0 0.0
        %693 = vmatpush1.msra.mxu0 0.0
        %694 = vmatprep.subr.mxu0 0.0
        %695 = vmatpush1.msra.mxu0 0.0
        %696 = vmatprep.subr.mxu0 0.0
        %697 = vmatpush1.msra.mxu0 0.0
        %698 = vmatprep.subr.mxu0 0.0
        %699 = vmatpush1.msra.mxu0 0.0
        %700 = vmatprep.subr.mxu0 0.0
        %701 = vmatpush1.msra.mxu0 0.0
        %702 = vmatprep.subr.mxu0 0.0
        %703 = vmatpush1.msra.mxu0 0.0
        %704 = vmatprep.subr.mxu0 0.0
        %705 = vmatpush1.msra.mxu0 0.0
        %706 = vmatprep.subr.mxu0 0.0
        %707 = vmatpush1.msra.mxu0 0.0
        %708 = vmatprep.subr.mxu0 0.0
        %709 = vmatpush1.msra.mxu0 0.0
        %710 = vmatprep.subr.mxu0 0.0
        %711 = vmatpush1.msra.mxu0 0.0
        %712 = vmatprep.subr.mxu0 0.0
        %713 = vmatpush1.msra.mxu0 0.0
        %714 = vmatprep.subr.mxu0 0.0
        %715 = vmatpush1.msra.mxu0 0.0
        %716 = vmatprep.subr.mxu0 0.0
        %717 = vmatpush1.msra.mxu0 0.0
        %718 = vmatprep.subr.mxu0 0.0
        %719 = vmatpush1.msra.mxu0 0.0
        %720 = vmatprep.subr.mxu0 0.0
        %721 = vmatpush1.msra.mxu0 0.0
        %722 = vmatprep.mubr.f32.mxu0 0.0
        %723 = vmatmul.mubr.f32.gmra.mrb[0].mxu0 %v653
        %v724 = vpop.f32.mrb[0].mxu0
        %v725 = vadd.f32 0.0, %v724
        %v726 = vpop.f32.mrb[0].mxu0
        %v727 = vadd.f32 0.0, %v726
        %728 = vmatprep.mubr.f32.mxu0 0.0
        %729 = vmatmul.mubr.f32.gmra.mrb[0].mxu0 %v656
        %v730 = vpop.f32.mrb[0].mxu0
        %v731 = vadd.f32 0.0, %v730
        %v732 = vpop.f32.mrb[0].mxu0
        %v733 = vadd.f32 0.0, %v732
        %734 = vdwg.mxu0
        %735 = vmatprep.subr.mxu0 %v644
        %736 = vmatpush1.msra.mxu0 %v642
        %737 = vmatprep.subr.mxu0 %v650
        %738 = vmatpush1.msra.mxu0 %v648
        %739 = vmatprep.subr.mxu0 0.0
        %740 = vmatpush1.msra.mxu0 0.0
        %741 = vmatprep.subr.mxu0 0.0
        %742 = vmatpush1.msra.mxu0 0.0
        %743 = vmatprep.subr.mxu0 0.0
        %744 = vmatpush1.msra.mxu0 0.0
        %745 = vmatprep.subr.mxu0 0.0
        %746 = vmatpush1.msra.mxu0 0.0
        %747 = vmatprep.subr.mxu0 0.0
        %748 = vmatpush1.msra.mxu0 0.0
        %749 = vmatprep.subr.mxu0 0.0
        %750 = vmatpush1.msra.mxu0 0.0
        %751 = vmatprep.subr.mxu0 0.0
        %752 = vmatpush1.msra.mxu0 0.0
        %753 = vmatprep.subr.mxu0 0.0
        %754 = vmatpush1.msra.mxu0 0.0
        %755 = vmatprep.subr.mxu0 0.0
        %756 = vmatpush1.msra.mxu0 0.0
        %757 = vmatprep.subr.mxu0 0.0
        %758 = vmatpush1.msra.mxu0 0.0
        %759 = vmatprep.subr.mxu0 0.0
        %760 = vmatpush1.msra.mxu0 0.0
        %761 = vmatprep.subr.mxu0 0.0
        %762 = vmatpush1.msra.mxu0 0.0
        %763 = vmatprep.subr.mxu0 0.0
        %764 = vmatpush1.msra.mxu0 0.0
        %765 = vmatprep.subr.mxu0 0.0
        %766 = vmatpush1.msra.mxu0 0.0
        %767 = vmatprep.subr.mxu0 0.0
        %768 = vmatpush1.msra.mxu0 0.0
        %769 = vmatprep.subr.mxu0 0.0
        %770 = vmatpush1.msra.mxu0 0.0
        %771 = vmatprep.subr.mxu0 0.0
        %772 = vmatpush1.msra.mxu0 0.0
        %773 = vmatprep.subr.mxu0 0.0
        %774 = vmatpush1.msra.mxu0 0.0
        %775 = vmatprep.subr.mxu0 0.0
        %776 = vmatpush1.msra.mxu0 0.0
        %777 = vmatprep.subr.mxu0 0.0
        %778 = vmatpush1.msra.mxu0 0.0
        %779 = vmatprep.subr.mxu0 0.0
        %780 = vmatpush1.msra.mxu0 0.0
        %781 = vmatprep.subr.mxu0 0.0
        %782 = vmatpush1.msra.mxu0 0.0
        %783 = vmatprep.subr.mxu0 0.0
        %784 = vmatpush1.msra.mxu0 0.0
        %785 = vmatprep.subr.mxu0 0.0
        %786 = vmatpush1.msra.mxu0 0.0
        %787 = vmatprep.subr.mxu0 0.0
        %788 = vmatpush1.msra.mxu0 0.0
        %789 = vmatprep.subr.mxu0 0.0
        %790 = vmatpush1.msra.mxu0 0.0
        %791 = vmatprep.subr.mxu0 0.0
        %792 = vmatpush1.msra.mxu0 0.0
        %793 = vmatprep.subr.mxu0 0.0
        %794 = vmatpush1.msra.mxu0 0.0
        %795 = vmatprep.subr.mxu0 0.0
        %796 = vmatpush1.msra.mxu0 0.0
        %797 = vmatprep.subr.mxu0 0.0
        %798 = vmatpush1.msra.mxu0 0.0
        %799 = vmatprep.mubr.f32.mxu0 0.0
        %800 = vmatmul.mubr.f32.gmra.mrb[0].mxu0 %v570
        %v801 = vpop.f32.mrb[0].mxu0
        %v802 = vadd.f32 0.0, %v801
        %v803 = vpop.f32.mrb[0].mxu0
        %v804 = vadd.f32 0.0, %v803
        %805 = vmatprep.mubr.f32.mxu0 0.0
        %806 = vmatmul.mubr.f32.gmra.mrb[0].mxu0 %v573
        %v807 = vpop.f32.mrb[0].mxu0
        %v808 = vadd.f32 0.0, %v807
        %v809 = vpop.f32.mrb[0].mxu0
        %v810 = vadd.f32 0.0, %v809
        %811 = vdwg.mxu0
        %812 = vmatprep.subr.mxu0 %v727
        %813 = vmatpush1.msra.mxu0 %v725
        %814 = vmatprep.subr.mxu0 %v733
        %815 = vmatpush1.msra.mxu0 %v731
        %816 = vmatprep.subr.mxu0 0.0
        %817 = vmatpush1.msra.mxu0 0.0
        %818 = vmatprep.subr.mxu0 0.0
        %819 = vmatpush1.msra.mxu0 0.0
        %820 = vmatprep.subr.mxu0 0.0
        %821 = vmatpush1.msra.mxu0 0.0
        %822 = vmatprep.subr.mxu0 0.0
        %823 = vmatpush1.msra.mxu0 0.0
        %824 = vmatprep.subr.mxu0 0.0
        %825 = vmatpush1.msra.mxu0 0.0
        %826 = vmatprep.subr.mxu0 0.0
        %827 = vmatpush1.msra.mxu0 0.0
        %828 = vmatprep.subr.mxu0 0.0
        %829 = vmatpush1.msra.mxu0 0.0
        %830 = vmatprep.subr.mxu0 0.0
        %831 = vmatpush1.msra.mxu0 0.0
        %832 = vmatprep.subr.mxu0 0.0
        %833 = vmatpush1.msra.mxu0 0.0
        %834 = vmatprep.subr.mxu0 0.0
        %835 = vmatpush1.msra.mxu0 0.0
        %836 = vmatprep.subr.mxu0 0.0
        %837 = vmatpush1.msra.mxu0 0.0
        %838 = vmatprep.subr.mxu0 0.0
        %839 = vmatpush1.msra.mxu0 0.0
        %840 = vmatprep.subr.mxu0 0.0
        %841 = vmatpush1.msra.mxu0 0.0
        %842 = vmatprep.subr.mxu0 0.0
        %843 = vmatpush1.msra.mxu0 0.0
        %844 = vmatprep.subr.mxu0 0.0
        %845 = vmatpush1.msra.mxu0 0.0
        %846 = vmatprep.subr.mxu0 0.0
        %847 = vmatpush1.msra.mxu0 0.0
        %848 = vmatprep.subr.mxu0 0.0
        %849 = vmatpush1.msra.mxu0 0.0
        %850 = vmatprep.subr.mxu0 0.0
        %851 = vmatpush1.msra.mxu0 0.0
        %852 = vmatprep.subr.mxu0 0.0
        %853 = vmatpush1.msra.mxu0 0.0
        %854 = vmatprep.subr.mxu0 0.0
        %855 = vmatpush1.msra.mxu0 0.0
        %856 = vmatprep.subr.mxu0 0.0
        %857 = vmatpush1.msra.mxu0 0.0
        %858 = vmatprep.subr.mxu0 0.0
        %859 = vmatpush1.msra.mxu0 0.0
        %860 = vmatprep.subr.mxu0 0.0
        %861 = vmatpush1.msra.mxu0 0.0
        %862 = vmatprep.subr.mxu0 0.0
        %863 = vmatpush1.msra.mxu0 0.0
        %864 = vmatprep.subr.mxu0 0.0
        %865 = vmatpush1.msra.mxu0 0.0
        %866 = vmatprep.subr.mxu0 0.0
        %867 = vmatpush1.msra.mxu0 0.0
        %868 = vmatprep.subr.mxu0 0.0
        %869 = vmatpush1.msra.mxu0 0.0
        %870 = vmatprep.subr.mxu0 0.0
        %871 = vmatpush1.msra.mxu0 0.0
        %872 = vmatprep.subr.mxu0 0.0
        %873 = vmatpush1.msra.mxu0 0.0
        %874 = vmatprep.subr.mxu0 0.0
        %875 = vmatpush1.msra.mxu0 0.0
        %876 = vmatprep.mubr.f32.mxu0 0.0
        %877 = vmatmul.mubr.f32.gmra.mrb[0].mxu0 %v653
        %v878 = vpop.f32.mrb[0].mxu0
        %v879 = vadd.f32 0.0, %v878
        %v880 = vpop.f32.mrb[0].mxu0
        %v881 = vadd.f32 0.0, %v880
        %882 = vmatprep.mubr.f32.mxu0 0.0
        %883 = vmatmul.mubr.f32.gmra.mrb[0].mxu0 %v656
        %v884 = vpop.f32.mrb[0].mxu0
        %v885 = vadd.f32 0.0, %v884
        %v886 = vpop.f32.mrb[0].mxu0
        %v887 = vadd.f32 0.0, %v886
        %888 = vdwg.mxu0
        %v889 = vld [vmem:[#allocation8] sm:$0xff]
        %v890 = vld [vmem:[#allocation8 + $0x8] sm:$0xff]
        %v891 = vld [vmem:[#allocation8 + $0x10] sm:$0xff]
        %v892 = vld [vmem:[#allocation8 + $0x18] sm:$0xff]
        %v893 = vld [vmem:[#allocation8 + $0x20] sm:$0xff]
        %v894 = vld [vmem:[#allocation8 + $0x28] sm:$0xff]
        %v895 = vld [vmem:[#allocation8 + $0x30] sm:$0xff]
        %v896 = vld [vmem:[#allocation8 + $0x38] sm:$0xff]
        %v897 = vld [vmem:[#allocation8 + $0x40] sm:$0xff]
        %v898 = vld [vmem:[#allocation8 + $0x48] sm:$0xff]
        %v899 = vld [vmem:[#allocation8 + $0x50] sm:$0xff]
        %v900 = vld [vmem:[#allocation8 + $0x58] sm:$0xff]
        %v901 = vld [vmem:[#allocation8 + $0x60] sm:$0xff]
        %v902 = vld [vmem:[#allocation8 + $0x68] sm:$0xff]
        %v903 = vld [vmem:[#allocation8 + $0x70] sm:$0xff]
        %v904 = vld [vmem:[#allocation8 + $0x78] sm:$0xff]
        %v905 = vld [vmem:[#allocation8 + $0x80] sm:$0xff]
        %v906 = vld [vmem:[#allocation8 + $0x88] sm:$0xff]
        %v907 = vld [vmem:[#allocation8 + $0x90] sm:$0xff]
        %v908 = vld [vmem:[#allocation8 + $0x98] sm:$0xff]
        %v909 = vld [vmem:[#allocation8 + $0xa0] sm:$0xff]
        %v910 = vld [vmem:[#allocation8 + $0xa8] sm:$0xff]
        %v911 = vld [vmem:[#allocation8 + $0xb0] sm:$0xff]
        %v912 = vld [vmem:[#allocation8 + $0xb8] sm:$0xff]
        %v913 = vld [vmem:[#allocation8 + $0xc0] sm:$0xff]
        %v914 = vld [vmem:[#allocation8 + $0xc8] sm:$0xff]
        %v915 = vld [vmem:[#allocation8 + $0xd0] sm:$0xff]
        %v916 = vld [vmem:[#allocation8 + $0xd8] sm:$0xff]
        %v917 = vld [vmem:[#allocation8 + $0xe0] sm:$0xff]
        %v918 = vld [vmem:[#allocation8 + $0xe8] sm:$0xff]
        %v919 = vld [vmem:[#allocation8 + $0xf0] sm:$0xff]
        %v920 = vld [vmem:[#allocation8 + $0xf8] sm:$0xff]
        %v921 = vld [vmem:[#allocation8 + $0x100] sm:$0xff]
        %v922 = vld [vmem:[#allocation8 + $0x108] sm:$0xff]
        %v923 = vld [vmem:[#allocation8 + $0x110] sm:$0xff]
        %v924 = vld [vmem:[#allocation8 + $0x118] sm:$0xff]
        %v925 = vld [vmem:[#allocation8 + $0x120] sm:$0xff]
        %v926 = vld [vmem:[#allocation8 + $0x128] sm:$0xff]
        %v927 = vld [vmem:[#allocation8 + $0x130] sm:$0xff]
        %v928 = vld [vmem:[#allocation8 + $0x138] sm:$0xff]
        %v929 = vld [vmem:[#allocation8 + $0x140] sm:$0xff]
        %v930 = vld [vmem:[#allocation8 + $0x148] sm:$0xff]
        %v931 = vld [vmem:[#allocation8 + $0x150] sm:$0xff]
        %v932 = vld [vmem:[#allocation8 + $0x158] sm:$0xff]
        %v933 = vld [vmem:[#allocation8 + $0x160] sm:$0xff]
        %v934 = vld [vmem:[#allocation8 + $0x168] sm:$0xff]
        %v935 = vld [vmem:[#allocation8 + $0x170] sm:$0xff]
        %v936 = vld [vmem:[#allocation8 + $0x178] sm:$0xff]
        %v937 = vld [vmem:[#allocation8 + $0x180] sm:$0xff]
        %v938 = vld [vmem:[#allocation8 + $0x188] sm:$0xff]
        %v939 = vld [vmem:[#allocation8 + $0x190] sm:$0xff]
        %v940 = vld [vmem:[#allocation8 + $0x198] sm:$0xff]
        %v941 = vld [vmem:[#allocation8 + $0x1a0] sm:$0xff]
        %v942 = vld [vmem:[#allocation8 + $0x1a8] sm:$0xff]
        %v943 = vld [vmem:[#allocation8 + $0x1b0] sm:$0xff]
        %v944 = vld [vmem:[#allocation8 + $0x1b8] sm:$0xff]
        %v945 = vld [vmem:[#allocation8 + $0x1c0] sm:$0xff]
        %v946 = vld [vmem:[#allocation8 + $0x1c8] sm:$0xff]
        %v947 = vld [vmem:[#allocation8 + $0x1d0] sm:$0xff]
        %v948 = vld [vmem:[#allocation8 + $0x1d8] sm:$0xff]
        %v949 = vld [vmem:[#allocation8 + $0x1e0] sm:$0xff]
        %v950 = vld [vmem:[#allocation8 + $0x1e8] sm:$0xff]
        %v951 = vld [vmem:[#allocation8 + $0x1f0] sm:$0xff]
        %v952 = vld [vmem:[#allocation8 + $0x1f8] sm:$0xff]
        %v953 = vld [vmem:[#allocation8 + $0x200] sm:$0xff]
        %v954 = vld [vmem:[#allocation8 + $0x208] sm:$0xff]
        %v955 = vld [vmem:[#allocation8 + $0x210] sm:$0xff]
        %v956 = vld [vmem:[#allocation8 + $0x218] sm:$0xff]
        %v957 = vld [vmem:[#allocation8 + $0x220] sm:$0xff]
        %v958 = vld [vmem:[#allocation8 + $0x228] sm:$0xff]
        %v959 = vld [vmem:[#allocation8 + $0x230] sm:$0xff]
        %v960 = vld [vmem:[#allocation8 + $0x238] sm:$0xff]
        %v961 = vld [vmem:[#allocation8 + $0x240] sm:$0xff]
        %v962 = vld [vmem:[#allocation8 + $0x248] sm:$0xff]
        %v963 = vld [vmem:[#allocation8 + $0x250] sm:$0xff]
        %v964 = vld [vmem:[#allocation8 + $0x258] sm:$0xff]
        %v965 = vld [vmem:[#allocation8 + $0x260] sm:$0xff]
        %v966 = vld [vmem:[#allocation8 + $0x268] sm:$0xff]
        %v967 = vld [vmem:[#allocation8 + $0x270] sm:$0xff]
        %v968 = vld [vmem:[#allocation8 + $0x278] sm:$0xff]
        %v969 = vld [vmem:[#allocation8 + $0x280] sm:$0xff]
        %v970 = vld [vmem:[#allocation8 + $0x288] sm:$0xff]
        %v971 = vld [vmem:[#allocation8 + $0x290] sm:$0xff]
        %v972 = vld [vmem:[#allocation8 + $0x298] sm:$0xff]
        %v973 = vld [vmem:[#allocation8 + $0x2a0] sm:$0xff]
        %v974 = vld [vmem:[#allocation8 + $0x2a8] sm:$0xff]
        %v975 = vld [vmem:[#allocation8 + $0x2b0] sm:$0xff]
        %v976 = vld [vmem:[#allocation8 + $0x2b8] sm:$0xff]
        %v977 = vld [vmem:[#allocation8 + $0x2c0] sm:$0xff]
        %v978 = vld [vmem:[#allocation8 + $0x2c8] sm:$0xff]
        %v979 = vld [vmem:[#allocation8 + $0x2d0] sm:$0xff]
        %v980 = vld [vmem:[#allocation8 + $0x2d8] sm:$0xff]
        %v981 = vld [vmem:[#allocation8 + $0x2e0] sm:$0xff]
        %v982 = vld [vmem:[#allocation8 + $0x2e8] sm:$0xff]
        %v983 = vld [vmem:[#allocation8 + $0x2f0] sm:$0xff]
        %v984 = vld [vmem:[#allocation8 + $0x2f8] sm:$0xff]
        %v985 = vld [vmem:[#allocation8 + $0x300] sm:$0xff]
        %v986 = vld [vmem:[#allocation8 + $0x308] sm:$0xff]
        %v987 = vld [vmem:[#allocation8 + $0x310] sm:$0xff]
        %v988 = vld [vmem:[#allocation8 + $0x318] sm:$0xff]
        %v989 = vld [vmem:[#allocation8 + $0x320] sm:$0xff]
        %v990 = vld [vmem:[#allocation8 + $0x328] sm:$0xff]
        %v991 = vld [vmem:[#allocation8 + $0x330] sm:$0xff]
        %v992 = vld [vmem:[#allocation8 + $0x338] sm:$0xff]
        %v993 = vld [vmem:[#allocation8 + $0x340] sm:$0xff]
        %v994 = vld [vmem:[#allocation8 + $0x348] sm:$0xff]
        %v995 = vld [vmem:[#allocation8 + $0x350] sm:$0xff]
        %v996 = vld [vmem:[#allocation8 + $0x358] sm:$0xff]
        %v997 = vld [vmem:[#allocation8 + $0x360] sm:$0xff]
        %v998 = vld [vmem:[#allocation8 + $0x368] sm:$0xff]
        %v999 = vld [vmem:[#allocation8 + $0x370] sm:$0xff]
        %v1000 = vld [vmem:[#allocation8 + $0x378] sm:$0xff]
        %v1001 = vld [vmem:[#allocation8 + $0x380] sm:$0xff]
        %v1002 = vld [vmem:[#allocation8 + $0x388] sm:$0xff]
        %v1003 = vld [vmem:[#allocation8 + $0x390] sm:$0xff]
        %v1004 = vld [vmem:[#allocation8 + $0x398] sm:$0xff]
        %v1005 = vld [vmem:[#allocation8 + $0x3a0] sm:$0xff]
        %v1006 = vld [vmem:[#allocation8 + $0x3a8] sm:$0xff]
        %v1007 = vld [vmem:[#allocation8 + $0x3b0] sm:$0xff]
        %v1008 = vld [vmem:[#allocation8 + $0x3b8] sm:$0xff]
        %v1009 = vld [vmem:[#allocation8 + $0x3c0] sm:$0xff]
        %v1010 = vld [vmem:[#allocation8 + $0x3c8] sm:$0xff]
        %v1011 = vld [vmem:[#allocation8 + $0x3d0] sm:$0xff]
        %v1012 = vld [vmem:[#allocation8 + $0x3d8] sm:$0xff]
        %v1013 = vld [vmem:[#allocation8 + $0x3e0] sm:$0xff]
        %v1014 = vld [vmem:[#allocation8 + $0x3e8] sm:$0xff]
        %v1015 = vld [vmem:[#allocation8 + $0x3f0] sm:$0xff]
        %v1016 = vld [vmem:[#allocation8 + $0x3f8] sm:$0xff]
        %1017 = vmatprep.subr.mxu0 %v890
        %1018 = vmatpush1.msra.mxu0 %v889
        %1019 = vmatprep.subr.mxu0 %v894
        %1020 = vmatpush1.msra.mxu0 %v893
        %1021 = vmatprep.subr.mxu0 %v898
        %1022 = vmatpush1.msra.mxu0 %v897
        %1023 = vmatprep.subr.mxu0 %v902
        %1024 = vmatpush1.msra.mxu0 %v901
        %1025 = vmatprep.subr.mxu0 %v906
        %1026 = vmatpush1.msra.mxu0 %v905
        %1027 = vmatprep.subr.mxu0 %v910
        %1028 = vmatpush1.msra.mxu0 %v909
        %1029 = vmatprep.subr.mxu0 %v914
        %1030 = vmatpush1.msra.mxu0 %v913
        %1031 = vmatprep.subr.mxu0 %v918
        %1032 = vmatpush1.msra.mxu0 %v917
        %1033 = vmatprep.subr.mxu0 %v922
        %1034 = vmatpush1.msra.mxu0 %v921
        %1035 = vmatprep.subr.mxu0 %v926
        %1036 = vmatpush1.msra.mxu0 %v925
        %1037 = vmatprep.subr.mxu0 %v930
        %1038 = vmatpush1.msra.mxu0 %v929
        %1039 = vmatprep.subr.mxu0 %v934
        %1040 = vmatpush1.msra.mxu0 %v933
        %1041 = vmatprep.subr.mxu0 %v938
        %1042 = vmatpush1.msra.mxu0 %v937
        %1043 = vmatprep.subr.mxu0 %v942
        %1044 = vmatpush1.msra.mxu0 %v941
        %1045 = vmatprep.subr.mxu0 %v946
        %1046 = vmatpush1.msra.mxu0 %v945
        %1047 = vmatprep.subr.mxu0 %v950
        %1048 = vmatpush1.msra.mxu0 %v949
        %1049 = vmatprep.subr.mxu0 %v954
        %1050 = vmatpush1.msra.mxu0 %v953
        %1051 = vmatprep.subr.mxu0 %v958
        %1052 = vmatpush1.msra.mxu0 %v957
        %1053 = vmatprep.subr.mxu0 %v962
        %1054 = vmatpush1.msra.mxu0 %v961
        %1055 = vmatprep.subr.mxu0 %v966
        %1056 = vmatpush1.msra.mxu0 %v965
        %1057 = vmatprep.subr.mxu0 %v970
        %1058 = vmatpush1.msra.mxu0 %v969
        %1059 = vmatprep.subr.mxu0 %v974
        %1060 = vmatpush1.msra.mxu0 %v973
        %1061 = vmatprep.subr.mxu0 %v978
        %1062 = vmatpush1.msra.mxu0 %v977
        %1063 = vmatprep.subr.mxu0 %v982
        %1064 = vmatpush1.msra.mxu0 %v981
        %1065 = vmatprep.subr.mxu0 %v986
        %1066 = vmatpush1.msra.mxu0 %v985
        %1067 = vmatprep.subr.mxu0 %v990
        %1068 = vmatpush1.msra.mxu0 %v989
        %1069 = vmatprep.subr.mxu0 %v994
        %1070 = vmatpush1.msra.mxu0 %v993
        %1071 = vmatprep.subr.mxu0 %v998
        %1072 = vmatpush1.msra.mxu0 %v997
        %1073 = vmatprep.subr.mxu0 %v1002
        %1074 = vmatpush1.msra.mxu0 %v1001
        %1075 = vmatprep.subr.mxu0 %v1006
        %1076 = vmatpush1.msra.mxu0 %v1005
        %1077 = vmatprep.subr.mxu0 %v1010
        %1078 = vmatpush1.msra.mxu0 %v1009
        %1079 = vmatprep.subr.mxu0 %v1014
        %1080 = vmatpush1.msra.mxu0 %v1013
        %1081 = vmatprep.mubr.f32.mxu0 %v644
        %1082 = vmatmul.mubr.f32.gmra.mrb[0].mxu0 %v642
        %v1083 = vpop.f32.mrb[0].mxu0
        %v1084 = vadd.f32 0.0, %v1083
        %v1085 = vpop.f32.mrb[0].mxu0
        %v1086 = vadd.f32 0.0, %v1085
        %1087 = vmatprep.mubr.f32.mxu0 %v650
        %1088 = vmatmul.mubr.f32.gmra.mrb[0].mxu0 %v648
        %v1089 = vpop.f32.mrb[0].mxu0
        %v1090 = vadd.f32 0.0, %v1089
        %v1091 = vpop.f32.mrb[0].mxu0
        %v1092 = vadd.f32 0.0, %v1091
        %1093 = vdwg.mxu0
        %1094 = vmatprep.subr.mxu0 %v892
        %1095 = vmatpush1.msra.mxu0 %v891
        %1096 = vmatprep.subr.mxu0 %v896
        %1097 = vmatpush1.msra.mxu0 %v895
        %1098 = vmatprep.subr.mxu0 %v900
        %1099 = vmatpush1.msra.mxu0 %v899
        %1100 = vmatprep.subr.mxu0 %v904
        %1101 = vmatpush1.msra.mxu0 %v903
        %1102 = vmatprep.subr.mxu0 %v908
        %1103 = vmatpush1.msra.mxu0 %v907
        %1104 = vmatprep.subr.mxu0 %v912
        %1105 = vmatpush1.msra.mxu0 %v911
        %1106 = vmatprep.subr.mxu0 %v916
        %1107 = vmatpush1.msra.mxu0 %v915
        %1108 = vmatprep.subr.mxu0 %v920
        %1109 = vmatpush1.msra.mxu0 %v919
        %1110 = vmatprep.subr.mxu0 %v924
        %1111 = vmatpush1.msra.mxu0 %v923
        %1112 = vmatprep.subr.mxu0 %v928
        %1113 = vmatpush1.msra.mxu0 %v927
        %1114 = vmatprep.subr.mxu0 %v932
        %1115 = vmatpush1.msra.mxu0 %v931
        %1116 = vmatprep.subr.mxu0 %v936
        %1117 = vmatpush1.msra.mxu0 %v935
        %1118 = vmatprep.subr.mxu0 %v940
        %1119 = vmatpush1.msra.mxu0 %v939
        %1120 = vmatprep.subr.mxu0 %v944
        %1121 = vmatpush1.msra.mxu0 %v943
        %1122 = vmatprep.subr.mxu0 %v948
        %1123 = vmatpush1.msra.mxu0 %v947
        %1124 = vmatprep.subr.mxu0 %v952
        %1125 = vmatpush1.msra.mxu0 %v951
        %1126 = vmatprep.subr.mxu0 %v956
        %1127 = vmatpush1.msra.mxu0 %v955
        %1128 = vmatprep.subr.mxu0 %v960
        %1129 = vmatpush1.msra.mxu0 %v959
        %1130 = vmatprep.subr.mxu0 %v964
        %1131 = vmatpush1.msra.mxu0 %v963
        %1132 = vmatprep.subr.mxu0 %v968
        %1133 = vmatpush1.msra.mxu0 %v967
        %1134 = vmatprep.subr.mxu0 %v972
        %1135 = vmatpush1.msra.mxu0 %v971
        %1136 = vmatprep.subr.mxu0 %v976
        %1137 = vmatpush1.msra.mxu0 %v975
        %1138 = vmatprep.subr.mxu0 %v980
        %1139 = vmatpush1.msra.mxu0 %v979
        %1140 = vmatprep.subr.mxu0 %v984
        %1141 = vmatpush1.msra.mxu0 %v983
        %1142 = vmatprep.subr.mxu0 %v988
        %1143 = vmatpush1.msra.mxu0 %v987
        %1144 = vmatprep.subr.mxu0 %v992
        %1145 = vmatpush1.msra.mxu0 %v991
        %1146 = vmatprep.subr.mxu0 %v996
        %1147 = vmatpush1.msra.mxu0 %v995
        %1148 = vmatprep.subr.mxu0 %v1000
        %1149 = vmatpush1.msra.mxu0 %v999
        %1150 = vmatprep.subr.mxu0 %v1004
        %1151 = vmatpush1.msra.mxu0 %v1003
        %1152 = vmatprep.subr.mxu0 %v1008
        %1153 = vmatpush1.msra.mxu0 %v1007
        %1154 = vmatprep.subr.mxu0 %v1012
        %1155 = vmatpush1.msra.mxu0 %v1011
        %1156 = vmatprep.subr.mxu0 %v1016
        %1157 = vmatpush1.msra.mxu0 %v1015
        %1158 = vmatprep.mubr.f32.mxu0 %v644
        %1159 = vmatmul.mubr.f32.gmra.mrb[0].mxu0 %v642
        %v1160 = vpop.f32.mrb[0].mxu0
        %v1161 = vadd.f32 0.0, %v1160
        %v1162 = vpop.f32.mrb[0].mxu0
        %v1163 = vadd.f32 0.0, %v1162
        %1164 = vmatprep.mubr.f32.mxu0 %v650
        %1165 = vmatmul.mubr.f32.gmra.mrb[0].mxu0 %v648
        %v1166 = vpop.f32.mrb[0].mxu0
        %v1167 = vadd.f32 0.0, %v1166
        %v1168 = vpop.f32.mrb[0].mxu0
        %v1169 = vadd.f32 0.0, %v1168
        %1170 = vdwg.mxu0
        %v1171 = vld [vmem:[#allocation10] sm:$0xff]
        %v1172 = vld [vmem:[#allocation10 + $0x8] sm:$0xff]
        %v1173 = vld [vmem:[#allocation10 + $0x10] sm:$0xff]
        %v1174 = vld [vmem:[#allocation10 + $0x18] sm:$0xff]
        %v1175 = vld [vmem:[#allocation10 + $0x20] sm:$0xff]
        %v1176 = vld [vmem:[#allocation10 + $0x28] sm:$0xff]
        %v1177 = vld [vmem:[#allocation10 + $0x30] sm:$0xff]
        %v1178 = vld [vmem:[#allocation10 + $0x38] sm:$0xff]
        %v1179 = vld [vmem:[#allocation10 + $0x40] sm:$0xff]
        %v1180 = vld [vmem:[#allocation10 + $0x48] sm:$0xff]
        %v1181 = vld [vmem:[#allocation10 + $0x50] sm:$0xff]
        %v1182 = vld [vmem:[#allocation10 + $0x58] sm:$0xff]
        %v1183 = vld [vmem:[#allocation10 + $0x60] sm:$0xff]
        %v1184 = vld [vmem:[#allocation10 + $0x68] sm:$0xff]
        %v1185 = vld [vmem:[#allocation10 + $0x70] sm:$0xff]
        %v1186 = vld [vmem:[#allocation10 + $0x78] sm:$0xff]
        %v1187 = vld [vmem:[#allocation10 + $0x80] sm:$0xff]
        %v1188 = vld [vmem:[#allocation10 + $0x88] sm:$0xff]
        %v1189 = vld [vmem:[#allocation10 + $0x90] sm:$0xff]
        %v1190 = vld [vmem:[#allocation10 + $0x98] sm:$0xff]
        %v1191 = vld [vmem:[#allocation10 + $0xa0] sm:$0xff]
        %v1192 = vld [vmem:[#allocation10 + $0xa8] sm:$0xff]
        %v1193 = vld [vmem:[#allocation10 + $0xb0] sm:$0xff]
        %v1194 = vld [vmem:[#allocation10 + $0xb8] sm:$0xff]
        %v1195 = vld [vmem:[#allocation10 + $0xc0] sm:$0xff]
        %v1196 = vld [vmem:[#allocation10 + $0xc8] sm:$0xff]
        %v1197 = vld [vmem:[#allocation10 + $0xd0] sm:$0xff]
        %v1198 = vld [vmem:[#allocation10 + $0xd8] sm:$0xff]
        %v1199 = vld [vmem:[#allocation10 + $0xe0] sm:$0xff]
        %v1200 = vld [vmem:[#allocation10 + $0xe8] sm:$0xff]
        %v1201 = vld [vmem:[#allocation10 + $0xf0] sm:$0xff]
        %v1202 = vld [vmem:[#allocation10 + $0xf8] sm:$0xff]
        %v1203 = vld [vmem:[#allocation10 + $0x100] sm:$0xff]
        %v1204 = vld [vmem:[#allocation10 + $0x108] sm:$0xff]
        %v1205 = vld [vmem:[#allocation10 + $0x110] sm:$0xff]
        %v1206 = vld [vmem:[#allocation10 + $0x118] sm:$0xff]
        %v1207 = vld [vmem:[#allocation10 + $0x120] sm:$0xff]
        %v1208 = vld [vmem:[#allocation10 + $0x128] sm:$0xff]
        %v1209 = vld [vmem:[#allocation10 + $0x130] sm:$0xff]
        %v1210 = vld [vmem:[#allocation10 + $0x138] sm:$0xff]
        %v1211 = vld [vmem:[#allocation10 + $0x140] sm:$0xff]
        %v1212 = vld [vmem:[#allocation10 + $0x148] sm:$0xff]
        %v1213 = vld [vmem:[#allocation10 + $0x150] sm:$0xff]
        %v1214 = vld [vmem:[#allocation10 + $0x158] sm:$0xff]
        %v1215 = vld [vmem:[#allocation10 + $0x160] sm:$0xff]
        %v1216 = vld [vmem:[#allocation10 + $0x168] sm:$0xff]
        %v1217 = vld [vmem:[#allocation10 + $0x170] sm:$0xff]
        %v1218 = vld [vmem:[#allocation10 + $0x178] sm:$0xff]
        %v1219 = vld [vmem:[#allocation10 + $0x180] sm:$0xff]
        %v1220 = vld [vmem:[#allocation10 + $0x188] sm:$0xff]
        %v1221 = vld [vmem:[#allocation10 + $0x190] sm:$0xff]
        %v1222 = vld [vmem:[#allocation10 + $0x198] sm:$0xff]
        %v1223 = vld [vmem:[#allocation10 + $0x1a0] sm:$0xff]
        %v1224 = vld [vmem:[#allocation10 + $0x1a8] sm:$0xff]
        %v1225 = vld [vmem:[#allocation10 + $0x1b0] sm:$0xff]
        %v1226 = vld [vmem:[#allocation10 + $0x1b8] sm:$0xff]
        %v1227 = vld [vmem:[#allocation10 + $0x1c0] sm:$0xff]
        %v1228 = vld [vmem:[#allocation10 + $0x1c8] sm:$0xff]
        %v1229 = vld [vmem:[#allocation10 + $0x1d0] sm:$0xff]
        %v1230 = vld [vmem:[#allocation10 + $0x1d8] sm:$0xff]
        %v1231 = vld [vmem:[#allocation10 + $0x1e0] sm:$0xff]
        %v1232 = vld [vmem:[#allocation10 + $0x1e8] sm:$0xff]
        %v1233 = vld [vmem:[#allocation10 + $0x1f0] sm:$0xff]
        %v1234 = vld [vmem:[#allocation10 + $0x1f8] sm:$0xff]
        %v1235 = vld [vmem:[#allocation10 + $0x200] sm:$0xff]
        %v1236 = vld [vmem:[#allocation10 + $0x208] sm:$0xff]
        %v1237 = vld [vmem:[#allocation10 + $0x210] sm:$0xff]
        %v1238 = vld [vmem:[#allocation10 + $0x218] sm:$0xff]
        %v1239 = vld [vmem:[#allocation10 + $0x220] sm:$0xff]
        %v1240 = vld [vmem:[#allocation10 + $0x228] sm:$0xff]
        %v1241 = vld [vmem:[#allocation10 + $0x230] sm:$0xff]
        %v1242 = vld [vmem:[#allocation10 + $0x238] sm:$0xff]
        %v1243 = vld [vmem:[#allocation10 + $0x240] sm:$0xff]
        %v1244 = vld [vmem:[#allocation10 + $0x248] sm:$0xff]
        %v1245 = vld [vmem:[#allocation10 + $0x250] sm:$0xff]
        %v1246 = vld [vmem:[#allocation10 + $0x258] sm:$0xff]
        %v1247 = vld [vmem:[#allocation10 + $0x260] sm:$0xff]
        %v1248 = vld [vmem:[#allocation10 + $0x268] sm:$0xff]
        %v1249 = vld [vmem:[#allocation10 + $0x270] sm:$0xff]
        %v1250 = vld [vmem:[#allocation10 + $0x278] sm:$0xff]
        %v1251 = vld [vmem:[#allocation10 + $0x280] sm:$0xff]
        %v1252 = vld [vmem:[#allocation10 + $0x288] sm:$0xff]
        %v1253 = vld [vmem:[#allocation10 + $0x290] sm:$0xff]
        %v1254 = vld [vmem:[#allocation10 + $0x298] sm:$0xff]
        %v1255 = vld [vmem:[#allocation10 + $0x2a0] sm:$0xff]
        %v1256 = vld [vmem:[#allocation10 + $0x2a8] sm:$0xff]
        %v1257 = vld [vmem:[#allocation10 + $0x2b0] sm:$0xff]
        %v1258 = vld [vmem:[#allocation10 + $0x2b8] sm:$0xff]
        %v1259 = vld [vmem:[#allocation10 + $0x2c0] sm:$0xff]
        %v1260 = vld [vmem:[#allocation10 + $0x2c8] sm:$0xff]
        %v1261 = vld [vmem:[#allocation10 + $0x2d0] sm:$0xff]
        %v1262 = vld [vmem:[#allocation10 + $0x2d8] sm:$0xff]
        %v1263 = vld [vmem:[#allocation10 + $0x2e0] sm:$0xff]
        %v1264 = vld [vmem:[#allocation10 + $0x2e8] sm:$0xff]
        %v1265 = vld [vmem:[#allocation10 + $0x2f0] sm:$0xff]
        %v1266 = vld [vmem:[#allocation10 + $0x2f8] sm:$0xff]
        %v1267 = vld [vmem:[#allocation10 + $0x300] sm:$0xff]
        %v1268 = vld [vmem:[#allocation10 + $0x308] sm:$0xff]
        %v1269 = vld [vmem:[#allocation10 + $0x310] sm:$0xff]
        %v1270 = vld [vmem:[#allocation10 + $0x318] sm:$0xff]
        %v1271 = vld [vmem:[#allocation10 + $0x320] sm:$0xff]
        %v1272 = vld [vmem:[#allocation10 + $0x328] sm:$0xff]
        %v1273 = vld [vmem:[#allocation10 + $0x330] sm:$0xff]
        %v1274 = vld [vmem:[#allocation10 + $0x338] sm:$0xff]
        %v1275 = vld [vmem:[#allocation10 + $0x340] sm:$0xff]
        %v1276 = vld [vmem:[#allocation10 + $0x348] sm:$0xff]
        %v1277 = vld [vmem:[#allocation10 + $0x350] sm:$0xff]
        %v1278 = vld [vmem:[#allocation10 + $0x358] sm:$0xff]
        %v1279 = vld [vmem:[#allocation10 + $0x360] sm:$0xff]
        %v1280 = vld [vmem:[#allocation10 + $0x368] sm:$0xff]
        %v1281 = vld [vmem:[#allocation10 + $0x370] sm:$0xff]
        %v1282 = vld [vmem:[#allocation10 + $0x378] sm:$0xff]
        %v1283 = vld [vmem:[#allocation10 + $0x380] sm:$0xff]
        %v1284 = vld [vmem:[#allocation10 + $0x388] sm:$0xff]
        %v1285 = vld [vmem:[#allocation10 + $0x390] sm:$0xff]
        %v1286 = vld [vmem:[#allocation10 + $0x398] sm:$0xff]
        %v1287 = vld [vmem:[#allocation10 + $0x3a0] sm:$0xff]
        %v1288 = vld [vmem:[#allocation10 + $0x3a8] sm:$0xff]
        %v1289 = vld [vmem:[#allocation10 + $0x3b0] sm:$0xff]
        %v1290 = vld [vmem:[#allocation10 + $0x3b8] sm:$0xff]
        %v1291 = vld [vmem:[#allocation10 + $0x3c0] sm:$0xff]
        %v1292 = vld [vmem:[#allocation10 + $0x3c8] sm:$0xff]
        %v1293 = vld [vmem:[#allocation10 + $0x3d0] sm:$0xff]
        %v1294 = vld [vmem:[#allocation10 + $0x3d8] sm:$0xff]
        %v1295 = vld [vmem:[#allocation10 + $0x3e0] sm:$0xff]
        %v1296 = vld [vmem:[#allocation10 + $0x3e8] sm:$0xff]
        %v1297 = vld [vmem:[#allocation10 + $0x3f0] sm:$0xff]
        %v1298 = vld [vmem:[#allocation10 + $0x3f8] sm:$0xff]
        %1299 = vmatprep.subr.mxu0 %v1172
        %1300 = vmatpush1.msra.mxu0 %v1171
        %1301 = vmatprep.subr.mxu0 %v1176
        %1302 = vmatpush1.msra.mxu0 %v1175
        %1303 = vmatprep.subr.mxu0 %v1180
        %1304 = vmatpush1.msra.mxu0 %v1179
        %1305 = vmatprep.subr.mxu0 %v1184
        %1306 = vmatpush1.msra.mxu0 %v1183
        %1307 = vmatprep.subr.mxu0 %v1188
        %1308 = vmatpush1.msra.mxu0 %v1187
        %1309 = vmatprep.subr.mxu0 %v1192
        %1310 = vmatpush1.msra.mxu0 %v1191
        %1311 = vmatprep.subr.mxu0 %v1196
        %1312 = vmatpush1.msra.mxu0 %v1195
        %1313 = vmatprep.subr.mxu0 %v1200
        %1314 = vmatpush1.msra.mxu0 %v1199
        %1315 = vmatprep.subr.mxu0 %v1204
        %1316 = vmatpush1.msra.mxu0 %v1203
        %1317 = vmatprep.subr.mxu0 %v1208
        %1318 = vmatpush1.msra.mxu0 %v1207
        %1319 = vmatprep.subr.mxu0 %v1212
        %1320 = vmatpush1.msra.mxu0 %v1211
        %1321 = vmatprep.subr.mxu0 %v1216
        %1322 = vmatpush1.msra.mxu0 %v1215
        %1323 = vmatprep.subr.mxu0 %v1220
        %1324 = vmatpush1.msra.mxu0 %v1219
        %1325 = vmatprep.subr.mxu0 %v1224
        %1326 = vmatpush1.msra.mxu0 %v1223
        %1327 = vmatprep.subr.mxu0 %v1228
        %1328 = vmatpush1.msra.mxu0 %v1227
        %1329 = vmatprep.subr.mxu0 %v1232
        %1330 = vmatpush1.msra.mxu0 %v1231
        %1331 = vmatprep.subr.mxu0 %v1236
        %1332 = vmatpush1.msra.mxu0 %v1235
        %1333 = vmatprep.subr.mxu0 %v1240
        %1334 = vmatpush1.msra.mxu0 %v1239
        %1335 = vmatprep.subr.mxu0 %v1244
        %1336 = vmatpush1.msra.mxu0 %v1243
        %1337 = vmatprep.subr.mxu0 %v1248
        %1338 = vmatpush1.msra.mxu0 %v1247
        %1339 = vmatprep.subr.mxu0 %v1252
        %1340 = vmatpush1.msra.mxu0 %v1251
        %1341 = vmatprep.subr.mxu0 %v1256
        %1342 = vmatpush1.msra.mxu0 %v1255
        %1343 = vmatprep.subr.mxu0 %v1260
        %1344 = vmatpush1.msra.mxu0 %v1259
        %1345 = vmatprep.subr.mxu0 %v1264
        %1346 = vmatpush1.msra.mxu0 %v1263
        %1347 = vmatprep.subr.mxu0 %v1268
        %1348 = vmatpush1.msra.mxu0 %v1267
        %1349 = vmatprep.subr.mxu0 %v1272
        %1350 = vmatpush1.msra.mxu0 %v1271
        %1351 = vmatprep.subr.mxu0 %v1276
        %1352 = vmatpush1.msra.mxu0 %v1275
        %1353 = vmatprep.subr.mxu0 %v1280
        %1354 = vmatpush1.msra.mxu0 %v1279
        %1355 = vmatprep.subr.mxu0 %v1284
        %1356 = vmatpush1.msra.mxu0 %v1283
        %1357 = vmatprep.subr.mxu0 %v1288
        %1358 = vmatpush1.msra.mxu0 %v1287
        %1359 = vmatprep.subr.mxu0 %v1292
        %1360 = vmatpush1.msra.mxu0 %v1291
        %1361 = vmatprep.subr.mxu0 %v1296
        %1362 = vmatpush1.msra.mxu0 %v1295
        %1363 = vmatprep.mubr.f32.mxu0 %v727
        %1364 = vmatmul.mubr.f32.gmra.mrb[0].mxu0 %v725
        %v1365 = vpop.f32.mrb[0].mxu0
        %v1366 = vadd.f32 0.0, %v1365
        %v1367 = vpop.f32.mrb[0].mxu0
        %v1368 = vadd.f32 0.0, %v1367
        %1369 = vmatprep.mubr.f32.mxu0 %v733
        %1370 = vmatmul.mubr.f32.gmra.mrb[0].mxu0 %v731
        %v1371 = vpop.f32.mrb[0].mxu0
        %v1372 = vadd.f32 0.0, %v1371
        %v1373 = vpop.f32.mrb[0].mxu0
        %v1374 = vadd.f32 0.0, %v1373
        %1375 = vdwg.mxu0
        %1376 = vmatprep.subr.mxu0 %v1174
        %1377 = vmatpush1.msra.mxu0 %v1173
        %1378 = vmatprep.subr.mxu0 %v1178
        %1379 = vmatpush1.msra.mxu0 %v1177
        %1380 = vmatprep.subr.mxu0 %v1182
        %1381 = vmatpush1.msra.mxu0 %v1181
        %1382 = vmatprep.subr.mxu0 %v1186
        %1383 = vmatpush1.msra.mxu0 %v1185
        %1384 = vmatprep.subr.mxu0 %v1190
        %1385 = vmatpush1.msra.mxu0 %v1189
        %1386 = vmatprep.subr.mxu0 %v1194
        %1387 = vmatpush1.msra.mxu0 %v1193
        %1388 = vmatprep.subr.mxu0 %v1198
        %1389 = vmatpush1.msra.mxu0 %v1197
        %1390 = vmatprep.subr.mxu0 %v1202
        %1391 = vmatpush1.msra.mxu0 %v1201
        %1392 = vmatprep.subr.mxu0 %v1206
        %1393 = vmatpush1.msra.mxu0 %v1205
        %1394 = vmatprep.subr.mxu0 %v1210
        %1395 = vmatpush1.msra.mxu0 %v1209
        %1396 = vmatprep.subr.mxu0 %v1214
        %1397 = vmatpush1.msra.mxu0 %v1213
        %1398 = vmatprep.subr.mxu0 %v1218
        %1399 = vmatpush1.msra.mxu0 %v1217
        %1400 = vmatprep.subr.mxu0 %v1222
        %1401 = vmatpush1.msra.mxu0 %v1221
        %1402 = vmatprep.subr.mxu0 %v1226
        %1403 = vmatpush1.msra.mxu0 %v1225
        %1404 = vmatprep.subr.mxu0 %v1230
        %1405 = vmatpush1.msra.mxu0 %v1229
        %1406 = vmatprep.subr.mxu0 %v1234
        %1407 = vmatpush1.msra.mxu0 %v1233
        %1408 = vmatprep.subr.mxu0 %v1238
        %1409 = vmatpush1.msra.mxu0 %v1237
        %1410 = vmatprep.subr.mxu0 %v1242
        %1411 = vmatpush1.msra.mxu0 %v1241
        %1412 = vmatprep.subr.mxu0 %v1246
        %1413 = vmatpush1.msra.mxu0 %v1245
        %1414 = vmatprep.subr.mxu0 %v1250
        %1415 = vmatpush1.msra.mxu0 %v1249
        %1416 = vmatprep.subr.mxu0 %v1254
        %1417 = vmatpush1.msra.mxu0 %v1253
        %1418 = vmatprep.subr.mxu0 %v1258
        %1419 = vmatpush1.msra.mxu0 %v1257
        %1420 = vmatprep.subr.mxu0 %v1262
        %1421 = vmatpush1.msra.mxu0 %v1261
        %1422 = vmatprep.subr.mxu0 %v1266
        %1423 = vmatpush1.msra.mxu0 %v1265
        %1424 = vmatprep.subr.mxu0 %v1270
        %1425 = vmatpush1.msra.mxu0 %v1269
        %1426 = vmatprep.subr.mxu0 %v1274
        %1427 = vmatpush1.msra.mxu0 %v1273
        %1428 = vmatprep.subr.mxu0 %v1278
        %1429 = vmatpush1.msra.mxu0 %v1277
        %1430 = vmatprep.subr.mxu0 %v1282
        %1431 = vmatpush1.msra.mxu0 %v1281
        %1432 = vmatprep.subr.mxu0 %v1286
        %1433 = vmatpush1.msra.mxu0 %v1285
        %1434 = vmatprep.subr.mxu0 %v1290
        %1435 = vmatpush1.msra.mxu0 %v1289
        %1436 = vmatprep.subr.mxu0 %v1294
        %1437 = vmatpush1.msra.mxu0 %v1293
        %1438 = vmatprep.subr.mxu0 %v1298
        %1439 = vmatpush1.msra.mxu0 %v1297
        %1440 = vmatprep.mubr.f32.mxu0 %v727
        %1441 = vmatmul.mubr.f32.gmra.mrb[0].mxu0 %v725
        %v1442 = vpop.f32.mrb[0].mxu0
        %v1443 = vadd.f32 0.0, %v1442
        %v1444 = vpop.f32.mrb[0].mxu0
        %v1445 = vadd.f32 0.0, %v1444
        %1446 = vmatprep.mubr.f32.mxu0 %v733
        %1447 = vmatmul.mubr.f32.gmra.mrb[0].mxu0 %v731
        %v1448 = vpop.f32.mrb[0].mxu0
        %v1449 = vadd.f32 0.0, %v1448
        %v1450 = vpop.f32.mrb[0].mxu0
        %v1451 = vadd.f32 0.0, %v1450
        %1452 = vdwg.mxu0
        %v1453 = vadd.f32 %v1161, %v1443
        %v1454 = vadd.f32 %v1163, %v1445
        %v1455 = vadd.f32 %v1167, %v1449
        %v1456 = vadd.f32 %v1169, %v1451
        %v1457 = vadd.f32 %v1453, %v558
        %v1458 = vadd.f32 %v1454, %v560
        %v1459 = vadd.f32 %v1455, %v564
        %v1460 = vadd.f32 %v1456, %v566
        %v1461 = vxor.u32 %v1457, 2147483648
        %v1462 = vxor.u32 %v1458, 2147483648
        %v1463 = vxor.u32 %v1459, 2147483648
        %v1464 = vxor.u32 %v1460, 2147483648
        %v1465 = vmul.f32 %v1461, 1.442695
        %v1466 = vpow.pop %v1465
        %v1467 = vmul.f32 %v1462, 1.442695
        %v1468 = vpow.pop %v1467
        %v1469 = vmul.f32 %v1463, 1.442695
        %v1470 = vpow.pop %v1469
        %v1471 = vmul.f32 %v1464, 1.442695
        %v1472 = vpow.pop %v1471
        %v1473 = vadd.f32 %v1466, 1.0
        %v1474 = vadd.f32 %v1468, 1.0
        %v1475 = vadd.f32 %v1470, 1.0
        %v1476 = vadd.f32 %v1472, 1.0
        %v1477 = vrcp.pop %v1473
        %v1478 = vmul.f32 1.0, %v1477
        %v1479 = vrcp.pop %v1474
        %v1480 = vmul.f32 1.0, %v1479
        %v1481 = vrcp.pop %v1475
        %v1482 = vmul.f32 1.0, %v1481
        %v1483 = vrcp.pop %v1476
        %v1484 = vmul.f32 1.0, %v1483
        %v1485 = vmul.f32 %v1478, %v1084
        %v1486 = vmul.f32 %v1480, %v1086
        %v1487 = vmul.f32 %v1482, %v1090
        %v1488 = vmul.f32 %v1484, %v1092
        %v1489 = vsub.f32 1.0, %v1478
        %v1490 = vsub.f32 1.0, %v1480
        %v1491 = vsub.f32 1.0, %v1482
        %v1492 = vsub.f32 1.0, %v1484
        %v1493 = vmul.f32 %v1489, %v1366
        %v1494 = vmul.f32 %v1490, %v1368
        %v1495 = vmul.f32 %v1491, %v1372
        %v1496 = vmul.f32 %v1492, %v1374
        %v1497 = vadd.f32 %v1485, %v1493
        %v1498 = vadd.f32 %v1486, %v1494
        %v1499 = vadd.f32 %v1487, %v1495
        %v1500 = vadd.f32 %v1488, %v1496
        %v1501 = vld [vmem:[#allocation11] sm:$0xff]
        %v1502 = vld [vmem:[#allocation11 + $0x8] sm:$0xff]
        %v1503 = vld [vmem:[#allocation11 + $0x10] sm:$0xff]
        %v1504 = vld [vmem:[#allocation11 + $0x18] sm:$0xff]
        %v1505 = vld [vmem:[#allocation11 + $0x20] sm:$0xff]
        %v1506 = vld [vmem:[#allocation11 + $0x28] sm:$0xff]
        %v1507 = vld [vmem:[#allocation11 + $0x30] sm:$0xff]
        %v1508 = vld [vmem:[#allocation11 + $0x38] sm:$0xff]
        %v1509 = vld [vmem:[#allocation11 + $0x40] sm:$0xff]
        %v1510 = vld [vmem:[#allocation11 + $0x48] sm:$0xff]
        %v1511 = vld [vmem:[#allocation11 + $0x50] sm:$0xff]
        %v1512 = vld [vmem:[#allocation11 + $0x58] sm:$0xff]
        %v1513 = vld [vmem:[#allocation11 + $0x60] sm:$0xff]
        %v1514 = vld [vmem:[#allocation11 + $0x68] sm:$0xff]
        %v1515 = vld [vmem:[#allocation11 + $0x70] sm:$0xff]
        %v1516 = vld [vmem:[#allocation11 + $0x78] sm:$0xff]
        %v1517 = vld [vmem:[#allocation11 + $0x80] sm:$0xff]
        %v1518 = vld [vmem:[#allocation11 + $0x88] sm:$0xff]
        %v1519 = vld [vmem:[#allocation11 + $0x90] sm:$0xff]
        %v1520 = vld [vmem:[#allocation11 + $0x98] sm:$0xff]
        %v1521 = vld [vmem:[#allocation11 + $0xa0] sm:$0xff]
        %v1522 = vld [vmem:[#allocation11 + $0xa8] sm:$0xff]
        %v1523 = vld [vmem:[#allocation11 + $0xb0] sm:$0xff]
        %v1524 = vld [vmem:[#allocation11 + $0xb8] sm:$0xff]
        %v1525 = vld [vmem:[#allocation11 + $0xc0] sm:$0xff]
        %v1526 = vld [vmem:[#allocation11 + $0xc8] sm:$0xff]
        %v1527 = vld [vmem:[#allocation11 + $0xd0] sm:$0xff]
        %v1528 = vld [vmem:[#allocation11 + $0xd8] sm:$0xff]
        %v1529 = vld [vmem:[#allocation11 + $0xe0] sm:$0xff]
        %v1530 = vld [vmem:[#allocation11 + $0xe8] sm:$0xff]
        %v1531 = vld [vmem:[#allocation11 + $0xf0] sm:$0xff]
        %v1532 = vld [vmem:[#allocation11 + $0xf8] sm:$0xff]
        %v1533 = vld [vmem:[#allocation11 + $0x100] sm:$0xff]
        %v1534 = vld [vmem:[#allocation11 + $0x108] sm:$0xff]
        %v1535 = vld [vmem:[#allocation11 + $0x110] sm:$0xff]
        %v1536 = vld [vmem:[#allocation11 + $0x118] sm:$0xff]
        %v1537 = vld [vmem:[#allocation11 + $0x120] sm:$0xff]
        %v1538 = vld [vmem:[#allocation11 + $0x128] sm:$0xff]
        %v1539 = vld [vmem:[#allocation11 + $0x130] sm:$0xff]
        %v1540 = vld [vmem:[#allocation11 + $0x138] sm:$0xff]
        %v1541 = vld [vmem:[#allocation11 + $0x140] sm:$0xff]
        %v1542 = vld [vmem:[#allocation11 + $0x148] sm:$0xff]
        %v1543 = vld [vmem:[#allocation11 + $0x150] sm:$0xff]
        %v1544 = vld [vmem:[#allocation11 + $0x158] sm:$0xff]
        %v1545 = vld [vmem:[#allocation11 + $0x160] sm:$0xff]
        %v1546 = vld [vmem:[#allocation11 + $0x168] sm:$0xff]
        %v1547 = vld [vmem:[#allocation11 + $0x170] sm:$0xff]
        %v1548 = vld [vmem:[#allocation11 + $0x178] sm:$0xff]
        %v1549 = vld [vmem:[#allocation11 + $0x180] sm:$0xff]
        %v1550 = vld [vmem:[#allocation11 + $0x188] sm:$0xff]
        %v1551 = vld [vmem:[#allocation11 + $0x190] sm:$0xff]
        %v1552 = vld [vmem:[#allocation11 + $0x198] sm:$0xff]
        %v1553 = vld [vmem:[#allocation11 + $0x1a0] sm:$0xff]
        %v1554 = vld [vmem:[#allocation11 + $0x1a8] sm:$0xff]
        %v1555 = vld [vmem:[#allocation11 + $0x1b0] sm:$0xff]
        %v1556 = vld [vmem:[#allocation11 + $0x1b8] sm:$0xff]
        %v1557 = vld [vmem:[#allocation11 + $0x1c0] sm:$0xff]
        %v1558 = vld [vmem:[#allocation11 + $0x1c8] sm:$0xff]
        %v1559 = vld [vmem:[#allocation11 + $0x1d0] sm:$0xff]
        %v1560 = vld [vmem:[#allocation11 + $0x1d8] sm:$0xff]
        %v1561 = vld [vmem:[#allocation11 + $0x1e0] sm:$0xff]
        %v1562 = vld [vmem:[#allocation11 + $0x1e8] sm:$0xff]
        %v1563 = vld [vmem:[#allocation11 + $0x1f0] sm:$0xff]
        %v1564 = vld [vmem:[#allocation11 + $0x1f8] sm:$0xff]
        %s1565 = scalar_lea.vmem [#allocation8], 1024
        %v1566 = vld [vmem:[%s1565] sm:$0xff]
        %v1567 = vld [vmem:[%s1565 + $0x8] sm:$0xff]
        %v1568 = vld [vmem:[%s1565 + $0x10] sm:$0xff]
        %v1569 = vld [vmem:[%s1565 + $0x18] sm:$0xff]
        %v1570 = vld [vmem:[%s1565 + $0x20] sm:$0xff]
        %v1571 = vld [vmem:[%s1565 + $0x28] sm:$0xff]
        %v1572 = vld [vmem:[%s1565 + $0x30] sm:$0xff]
        %v1573 = vld [vmem:[%s1565 + $0x38] sm:$0xff]
        %v1574 = vld [vmem:[%s1565 + $0x40] sm:$0xff]
        %v1575 = vld [vmem:[%s1565 + $0x48] sm:$0xff]
        %v1576 = vld [vmem:[%s1565 + $0x50] sm:$0xff]
        %v1577 = vld [vmem:[%s1565 + $0x58] sm:$0xff]
        %v1578 = vld [vmem:[%s1565 + $0x60] sm:$0xff]
        %v1579 = vld [vmem:[%s1565 + $0x68] sm:$0xff]
        %v1580 = vld [vmem:[%s1565 + $0x70] sm:$0xff]
        %v1581 = vld [vmem:[%s1565 + $0x78] sm:$0xff]
        %v1582 = vld [vmem:[%s1565 + $0x80] sm:$0xff]
        %v1583 = vld [vmem:[%s1565 + $0x88] sm:$0xff]
        %v1584 = vld [vmem:[%s1565 + $0x90] sm:$0xff]
        %v1585 = vld [vmem:[%s1565 + $0x98] sm:$0xff]
        %v1586 = vld [vmem:[%s1565 + $0xa0] sm:$0xff]
        %v1587 = vld [vmem:[%s1565 + $0xa8] sm:$0xff]
        %v1588 = vld [vmem:[%s1565 + $0xb0] sm:$0xff]
        %v1589 = vld [vmem:[%s1565 + $0xb8] sm:$0xff]
        %v1590 = vld [vmem:[%s1565 + $0xc0] sm:$0xff]
        %v1591 = vld [vmem:[%s1565 + $0xc8] sm:$0xff]
        %v1592 = vld [vmem:[%s1565 + $0xd0] sm:$0xff]
        %v1593 = vld [vmem:[%s1565 + $0xd8] sm:$0xff]
        %v1594 = vld [vmem:[%s1565 + $0xe0] sm:$0xff]
        %v1595 = vld [vmem:[%s1565 + $0xe8] sm:$0xff]
        %v1596 = vld [vmem:[%s1565 + $0xf0] sm:$0xff]
        %v1597 = vld [vmem:[%s1565 + $0xf8] sm:$0xff]
        %v1598 = vld [vmem:[%s1565 + $0x100] sm:$0xff]
        %v1599 = vld [vmem:[%s1565 + $0x108] sm:$0xff]
        %v1600 = vld [vmem:[%s1565 + $0x110] sm:$0xff]
        %v1601 = vld [vmem:[%s1565 + $0x118] sm:$0xff]
        %v1602 = vld [vmem:[%s1565 + $0x120] sm:$0xff]
        %v1603 = vld [vmem:[%s1565 + $0x128] sm:$0xff]
        %v1604 = vld [vmem:[%s1565 + $0x130] sm:$0xff]
        %v1605 = vld [vmem:[%s1565 + $0x138] sm:$0xff]
        %v1606 = vld [vmem:[%s1565 + $0x140] sm:$0xff]
        %v1607 = vld [vmem:[%s1565 + $0x148] sm:$0xff]
        %v1608 = vld [vmem:[%s1565 + $0x150] sm:$0xff]
        %v1609 = vld [vmem:[%s1565 + $0x158] sm:$0xff]
        %v1610 = vld [vmem:[%s1565 + $0x160] sm:$0xff]
        %v1611 = vld [vmem:[%s1565 + $0x168] sm:$0xff]
        %v1612 = vld [vmem:[%s1565 + $0x170] sm:$0xff]
        %v1613 = vld [vmem:[%s1565 + $0x178] sm:$0xff]
        %v1614 = vld [vmem:[%s1565 + $0x180] sm:$0xff]
        %v1615 = vld [vmem:[%s1565 + $0x188] sm:$0xff]
        %v1616 = vld [vmem:[%s1565 + $0x190] sm:$0xff]
        %v1617 = vld [vmem:[%s1565 + $0x198] sm:$0xff]
        %v1618 = vld [vmem:[%s1565 + $0x1a0] sm:$0xff]
        %v1619 = vld [vmem:[%s1565 + $0x1a8] sm:$0xff]
        %v1620 = vld [vmem:[%s1565 + $0x1b0] sm:$0xff]
        %v1621 = vld [vmem:[%s1565 + $0x1b8] sm:$0xff]
        %v1622 = vld [vmem:[%s1565 + $0x1c0] sm:$0xff]
        %v1623 = vld [vmem:[%s1565 + $0x1c8] sm:$0xff]
        %v1624 = vld [vmem:[%s1565 + $0x1d0] sm:$0xff]
        %v1625 = vld [vmem:[%s1565 + $0x1d8] sm:$0xff]
        %v1626 = vld [vmem:[%s1565 + $0x1e0] sm:$0xff]
        %v1627 = vld [vmem:[%s1565 + $0x1e8] sm:$0xff]
        %v1628 = vld [vmem:[%s1565 + $0x1f0] sm:$0xff]
        %v1629 = vld [vmem:[%s1565 + $0x1f8] sm:$0xff]
        %v1630 = vld [vmem:[%s1565 + $0x200] sm:$0xff]
        %v1631 = vld [vmem:[%s1565 + $0x208] sm:$0xff]
        %v1632 = vld [vmem:[%s1565 + $0x210] sm:$0xff]
        %v1633 = vld [vmem:[%s1565 + $0x218] sm:$0xff]
        %v1634 = vld [vmem:[%s1565 + $0x220] sm:$0xff]
        %v1635 = vld [vmem:[%s1565 + $0x228] sm:$0xff]
        %v1636 = vld [vmem:[%s1565 + $0x230] sm:$0xff]
        %v1637 = vld [vmem:[%s1565 + $0x238] sm:$0xff]
        %v1638 = vld [vmem:[%s1565 + $0x240] sm:$0xff]
        %v1639 = vld [vmem:[%s1565 + $0x248] sm:$0xff]
        %v1640 = vld [vmem:[%s1565 + $0x250] sm:$0xff]
        %v1641 = vld [vmem:[%s1565 + $0x258] sm:$0xff]
        %v1642 = vld [vmem:[%s1565 + $0x260] sm:$0xff]
        %v1643 = vld [vmem:[%s1565 + $0x268] sm:$0xff]
        %v1644 = vld [vmem:[%s1565 + $0x270] sm:$0xff]
        %v1645 = vld [vmem:[%s1565 + $0x278] sm:$0xff]
        %v1646 = vld [vmem:[%s1565 + $0x280] sm:$0xff]
        %v1647 = vld [vmem:[%s1565 + $0x288] sm:$0xff]
        %v1648 = vld [vmem:[%s1565 + $0x290] sm:$0xff]
        %v1649 = vld [vmem:[%s1565 + $0x298] sm:$0xff]
        %v1650 = vld [vmem:[%s1565 + $0x2a0] sm:$0xff]
        %v1651 = vld [vmem:[%s1565 + $0x2a8] sm:$0xff]
        %v1652 = vld [vmem:[%s1565 + $0x2b0] sm:$0xff]
        %v1653 = vld [vmem:[%s1565 + $0x2b8] sm:$0xff]
        %v1654 = vld [vmem:[%s1565 + $0x2c0] sm:$0xff]
        %v1655 = vld [vmem:[%s1565 + $0x2c8] sm:$0xff]
        %v1656 = vld [vmem:[%s1565 + $0x2d0] sm:$0xff]
        %v1657 = vld [vmem:[%s1565 + $0x2d8] sm:$0xff]
        %v1658 = vld [vmem:[%s1565 + $0x2e0] sm:$0xff]
        %v1659 = vld [vmem:[%s1565 + $0x2e8] sm:$0xff]
        %v1660 = vld [vmem:[%s1565 + $0x2f0] sm:$0xff]
        %v1661 = vld [vmem:[%s1565 + $0x2f8] sm:$0xff]
        %v1662 = vld [vmem:[%s1565 + $0x300] sm:$0xff]
        %v1663 = vld [vmem:[%s1565 + $0x308] sm:$0xff]
        %v1664 = vld [vmem:[%s1565 + $0x310] sm:$0xff]
        %v1665 = vld [vmem:[%s1565 + $0x318] sm:$0xff]
        %v1666 = vld [vmem:[%s1565 + $0x320] sm:$0xff]
        %v1667 = vld [vmem:[%s1565 + $0x328] sm:$0xff]
        %v1668 = vld [vmem:[%s1565 + $0x330] sm:$0xff]
        %v1669 = vld [vmem:[%s1565 + $0x338] sm:$0xff]
        %v1670 = vld [vmem:[%s1565 + $0x340] sm:$0xff]
        %v1671 = vld [vmem:[%s1565 + $0x348] sm:$0xff]
        %v1672 = vld [vmem:[%s1565 + $0x350] sm:$0xff]
        %v1673 = vld [vmem:[%s1565 + $0x358] sm:$0xff]
        %v1674 = vld [vmem:[%s1565 + $0x360] sm:$0xff]
        %v1675 = vld [vmem:[%s1565 + $0x368] sm:$0xff]
        %v1676 = vld [vmem:[%s1565 + $0x370] sm:$0xff]
        %v1677 = vld [vmem:[%s1565 + $0x378] sm:$0xff]
        %v1678 = vld [vmem:[%s1565 + $0x380] sm:$0xff]
        %v1679 = vld [vmem:[%s1565 + $0x388] sm:$0xff]
        %v1680 = vld [vmem:[%s1565 + $0x390] sm:$0xff]
        %v1681 = vld [vmem:[%s1565 + $0x398] sm:$0xff]
        %v1682 = vld [vmem:[%s1565 + $0x3a0] sm:$0xff]
        %v1683 = vld [vmem:[%s1565 + $0x3a8] sm:$0xff]
        %v1684 = vld [vmem:[%s1565 + $0x3b0] sm:$0xff]
        %v1685 = vld [vmem:[%s1565 + $0x3b8] sm:$0xff]
        %v1686 = vld [vmem:[%s1565 + $0x3c0] sm:$0xff]
        %v1687 = vld [vmem:[%s1565 + $0x3c8] sm:$0xff]
        %v1688 = vld [vmem:[%s1565 + $0x3d0] sm:$0xff]
        %v1689 = vld [vmem:[%s1565 + $0x3d8] sm:$0xff]
        %v1690 = vld [vmem:[%s1565 + $0x3e0] sm:$0xff]
        %v1691 = vld [vmem:[%s1565 + $0x3e8] sm:$0xff]
        %v1692 = vld [vmem:[%s1565 + $0x3f0] sm:$0xff]
        %v1693 = vld [vmem:[%s1565 + $0x3f8] sm:$0xff]
        %1694 = vmatprep.subr.mxu0 %v1567
        %1695 = vmatpush1.msra.mxu0 %v1566
        %1696 = vmatprep.subr.mxu0 %v1571
        %1697 = vmatpush1.msra.mxu0 %v1570
        %1698 = vmatprep.subr.mxu0 %v1575
        %1699 = vmatpush1.msra.mxu0 %v1574
        %1700 = vmatprep.subr.mxu0 %v1579
        %1701 = vmatpush1.msra.mxu0 %v1578
        %1702 = vmatprep.subr.mxu0 %v1583
        %1703 = vmatpush1.msra.mxu0 %v1582
        %1704 = vmatprep.subr.mxu0 %v1587
        %1705 = vmatpush1.msra.mxu0 %v1586
        %1706 = vmatprep.subr.mxu0 %v1591
        %1707 = vmatpush1.msra.mxu0 %v1590
        %1708 = vmatprep.subr.mxu0 %v1595
        %1709 = vmatpush1.msra.mxu0 %v1594
        %1710 = vmatprep.subr.mxu0 %v1599
        %1711 = vmatpush1.msra.mxu0 %v1598
        %1712 = vmatprep.subr.mxu0 %v1603
        %1713 = vmatpush1.msra.mxu0 %v1602
        %1714 = vmatprep.subr.mxu0 %v1607
        %1715 = vmatpush1.msra.mxu0 %v1606
        %1716 = vmatprep.subr.mxu0 %v1611
        %1717 = vmatpush1.msra.mxu0 %v1610
        %1718 = vmatprep.subr.mxu0 %v1615
        %1719 = vmatpush1.msra.mxu0 %v1614
        %1720 = vmatprep.subr.mxu0 %v1619
        %1721 = vmatpush1.msra.mxu0 %v1618
        %1722 = vmatprep.subr.mxu0 %v1623
        %1723 = vmatpush1.msra.mxu0 %v1622
        %1724 = vmatprep.subr.mxu0 %v1627
        %1725 = vmatpush1.msra.mxu0 %v1626
        %1726 = vmatprep.subr.mxu0 %v1631
        %1727 = vmatpush1.msra.mxu0 %v1630
        %1728 = vmatprep.subr.mxu0 %v1635
        %1729 = vmatpush1.msra.mxu0 %v1634
        %1730 = vmatprep.subr.mxu0 %v1639
        %1731 = vmatpush1.msra.mxu0 %v1638
        %1732 = vmatprep.subr.mxu0 %v1643
        %1733 = vmatpush1.msra.mxu0 %v1642
        %1734 = vmatprep.subr.mxu0 %v1647
        %1735 = vmatpush1.msra.mxu0 %v1646
        %1736 = vmatprep.subr.mxu0 %v1651
        %1737 = vmatpush1.msra.mxu0 %v1650
        %1738 = vmatprep.subr.mxu0 %v1655
        %1739 = vmatpush1.msra.mxu0 %v1654
        %1740 = vmatprep.subr.mxu0 %v1659
        %1741 = vmatpush1.msra.mxu0 %v1658
        %1742 = vmatprep.subr.mxu0 %v1663
        %1743 = vmatpush1.msra.mxu0 %v1662
        %1744 = vmatprep.subr.mxu0 %v1667
        %1745 = vmatpush1.msra.mxu0 %v1666
        %1746 = vmatprep.subr.mxu0 %v1671
        %1747 = vmatpush1.msra.mxu0 %v1670
        %1748 = vmatprep.subr.mxu0 %v1675
        %1749 = vmatpush1.msra.mxu0 %v1674
        %1750 = vmatprep.subr.mxu0 %v1679
        %1751 = vmatpush1.msra.mxu0 %v1678
        %1752 = vmatprep.subr.mxu0 %v1683
        %1753 = vmatpush1.msra.mxu0 %v1682
        %1754 = vmatprep.subr.mxu0 %v1687
        %1755 = vmatpush1.msra.mxu0 %v1686
        %1756 = vmatprep.subr.mxu0 %v1691
        %1757 = vmatpush1.msra.mxu0 %v1690
        %1758 = vmatprep.mubr.f32.mxu0 %v804
        %1759 = vmatmul.mubr.f32.gmra.mrb[0].mxu0 %v802
        %v1760 = vpop.f32.mrb[0].mxu0
        %v1761 = vadd.f32 0.0, %v1760
        %v1762 = vpop.f32.mrb[0].mxu0
        %v1763 = vadd.f32 0.0, %v1762
        %1764 = vmatprep.mubr.f32.mxu0 %v810
        %1765 = vmatmul.mubr.f32.gmra.mrb[0].mxu0 %v808
        %v1766 = vpop.f32.mrb[0].mxu0
        %v1767 = vadd.f32 0.0, %v1766
        %v1768 = vpop.f32.mrb[0].mxu0
        %v1769 = vadd.f32 0.0, %v1768
        %1770 = vdwg.mxu0
        %1771 = vmatprep.subr.mxu0 %v1569
        %1772 = vmatpush1.msra.mxu0 %v1568
        %1773 = vmatprep.subr.mxu0 %v1573
        %1774 = vmatpush1.msra.mxu0 %v1572
        %1775 = vmatprep.subr.mxu0 %v1577
        %1776 = vmatpush1.msra.mxu0 %v1576
        %1777 = vmatprep.subr.mxu0 %v1581
        %1778 = vmatpush1.msra.mxu0 %v1580
        %1779 = vmatprep.subr.mxu0 %v1585
        %1780 = vmatpush1.msra.mxu0 %v1584
        %1781 = vmatprep.subr.mxu0 %v1589
        %1782 = vmatpush1.msra.mxu0 %v1588
        %1783 = vmatprep.subr.mxu0 %v1593
        %1784 = vmatpush1.msra.mxu0 %v1592
        %1785 = vmatprep.subr.mxu0 %v1597
        %1786 = vmatpush1.msra.mxu0 %v1596
        %1787 = vmatprep.subr.mxu0 %v1601
        %1788 = vmatpush1.msra.mxu0 %v1600
        %1789 = vmatprep.subr.mxu0 %v1605
        %1790 = vmatpush1.msra.mxu0 %v1604
        %1791 = vmatprep.subr.mxu0 %v1609
        %1792 = vmatpush1.msra.mxu0 %v1608
        %1793 = vmatprep.subr.mxu0 %v1613
        %1794 = vmatpush1.msra.mxu0 %v1612
        %1795 = vmatprep.subr.mxu0 %v1617
        %1796 = vmatpush1.msra.mxu0 %v1616
        %1797 = vmatprep.subr.mxu0 %v1621
        %1798 = vmatpush1.msra.mxu0 %v1620
        %1799 = vmatprep.subr.mxu0 %v1625
        %1800 = vmatpush1.msra.mxu0 %v1624
        %1801 = vmatprep.subr.mxu0 %v1629
        %1802 = vmatpush1.msra.mxu0 %v1628
        %1803 = vmatprep.subr.mxu0 %v1633
        %1804 = vmatpush1.msra.mxu0 %v1632
        %1805 = vmatprep.subr.mxu0 %v1637
        %1806 = vmatpush1.msra.mxu0 %v1636
        %1807 = vmatprep.subr.mxu0 %v1641
        %1808 = vmatpush1.msra.mxu0 %v1640
        %1809 = vmatprep.subr.mxu0 %v1645
        %1810 = vmatpush1.msra.mxu0 %v1644
        %1811 = vmatprep.subr.mxu0 %v1649
        %1812 = vmatpush1.msra.mxu0 %v1648
        %1813 = vmatprep.subr.mxu0 %v1653
        %1814 = vmatpush1.msra.mxu0 %v1652
        %1815 = vmatprep.subr.mxu0 %v1657
        %1816 = vmatpush1.msra.mxu0 %v1656
        %1817 = vmatprep.subr.mxu0 %v1661
        %1818 = vmatpush1.msra.mxu0 %v1660
        %1819 = vmatprep.subr.mxu0 %v1665
        %1820 = vmatpush1.msra.mxu0 %v1664
        %1821 = vmatprep.subr.mxu0 %v1669
        %1822 = vmatpush1.msra.mxu0 %v1668
        %1823 = vmatprep.subr.mxu0 %v1673
        %1824 = vmatpush1.msra.mxu0 %v1672
        %1825 = vmatprep.subr.mxu0 %v1677
        %1826 = vmatpush1.msra.mxu0 %v1676
        %1827 = vmatprep.subr.mxu0 %v1681
        %1828 = vmatpush1.msra.mxu0 %v1680
        %1829 = vmatprep.subr.mxu0 %v1685
        %1830 = vmatpush1.msra.mxu0 %v1684
        %1831 = vmatprep.subr.mxu0 %v1689
        %1832 = vmatpush1.msra.mxu0 %v1688
        %1833 = vmatprep.subr.mxu0 %v1693
        %1834 = vmatpush1.msra.mxu0 %v1692
        %1835 = vmatprep.mubr.f32.mxu0 %v804
        %1836 = vmatmul.mubr.f32.gmra.mrb[0].mxu0 %v802
        %v1837 = vpop.f32.mrb[0].mxu0
        %v1838 = vadd.f32 0.0, %v1837
        %v1839 = vpop.f32.mrb[0].mxu0
        %v1840 = vadd.f32 0.0, %v1839
        %1841 = vmatprep.mubr.f32.mxu0 %v810
        %1842 = vmatmul.mubr.f32.gmra.mrb[0].mxu0 %v808
        %v1843 = vpop.f32.mrb[0].mxu0
        %v1844 = vadd.f32 0.0, %v1843
        %v1845 = vpop.f32.mrb[0].mxu0
        %v1846 = vadd.f32 0.0, %v1845
        %1847 = vdwg.mxu0
        %s1848 = scalar_lea.vmem [#allocation10], 1024
        %v1849 = vld [vmem:[%s1848] sm:$0xff]
        %v1850 = vld [vmem:[%s1848 + $0x8] sm:$0xff]
        %v1851 = vld [vmem:[%s1848 + $0x10] sm:$0xff]
        %v1852 = vld [vmem:[%s1848 + $0x18] sm:$0xff]
        %v1853 = vld [vmem:[%s1848 + $0x20] sm:$0xff]
        %v1854 = vld [vmem:[%s1848 + $0x28] sm:$0xff]
        %v1855 = vld [vmem:[%s1848 + $0x30] sm:$0xff]
        %v1856 = vld [vmem:[%s1848 + $0x38] sm:$0xff]
        %v1857 = vld [vmem:[%s1848 + $0x40] sm:$0xff]
        %v1858 = vld [vmem:[%s1848 + $0x48] sm:$0xff]
        %v1859 = vld [vmem:[%s1848 + $0x50] sm:$0xff]
        %v1860 = vld [vmem:[%s1848 + $0x58] sm:$0xff]
        %v1861 = vld [vmem:[%s1848 + $0x60] sm:$0xff]
        %v1862 = vld [vmem:[%s1848 + $0x68] sm:$0xff]
        %v1863 = vld [vmem:[%s1848 + $0x70] sm:$0xff]
        %v1864 = vld [vmem:[%s1848 + $0x78] sm:$0xff]
        %v1865 = vld [vmem:[%s1848 + $0x80] sm:$0xff]
        %v1866 = vld [vmem:[%s1848 + $0x88] sm:$0xff]
        %v1867 = vld [vmem:[%s1848 + $0x90] sm:$0xff]
        %v1868 = vld [vmem:[%s1848 + $0x98] sm:$0xff]
        %v1869 = vld [vmem:[%s1848 + $0xa0] sm:$0xff]
        %v1870 = vld [vmem:[%s1848 + $0xa8] sm:$0xff]
        %v1871 = vld [vmem:[%s1848 + $0xb0] sm:$0xff]
        %v1872 = vld [vmem:[%s1848 + $0xb8] sm:$0xff]
        %v1873 = vld [vmem:[%s1848 + $0xc0] sm:$0xff]
        %v1874 = vld [vmem:[%s1848 + $0xc8] sm:$0xff]
        %v1875 = vld [vmem:[%s1848 + $0xd0] sm:$0xff]
        %v1876 = vld [vmem:[%s1848 + $0xd8] sm:$0xff]
        %v1877 = vld [vmem:[%s1848 + $0xe0] sm:$0xff]
        %v1878 = vld [vmem:[%s1848 + $0xe8] sm:$0xff]
        %v1879 = vld [vmem:[%s1848 + $0xf0] sm:$0xff]
        %v1880 = vld [vmem:[%s1848 + $0xf8] sm:$0xff]
        %v1881 = vld [vmem:[%s1848 + $0x100] sm:$0xff]
        %v1882 = vld [vmem:[%s1848 + $0x108] sm:$0xff]
        %v1883 = vld [vmem:[%s1848 + $0x110] sm:$0xff]
        %v1884 = vld [vmem:[%s1848 + $0x118] sm:$0xff]
        %v1885 = vld [vmem:[%s1848 + $0x120] sm:$0xff]
        %v1886 = vld [vmem:[%s1848 + $0x128] sm:$0xff]
        %v1887 = vld [vmem:[%s1848 + $0x130] sm:$0xff]
        %v1888 = vld [vmem:[%s1848 + $0x138] sm:$0xff]
        %v1889 = vld [vmem:[%s1848 + $0x140] sm:$0xff]
        %v1890 = vld [vmem:[%s1848 + $0x148] sm:$0xff]
        %v1891 = vld [vmem:[%s1848 + $0x150] sm:$0xff]
        %v1892 = vld [vmem:[%s1848 + $0x158] sm:$0xff]
        %v1893 = vld [vmem:[%s1848 + $0x160] sm:$0xff]
        %v1894 = vld [vmem:[%s1848 + $0x168] sm:$0xff]
        %v1895 = vld [vmem:[%s1848 + $0x170] sm:$0xff]
        %v1896 = vld [vmem:[%s1848 + $0x178] sm:$0xff]
        %v1897 = vld [vmem:[%s1848 + $0x180] sm:$0xff]
        %v1898 = vld [vmem:[%s1848 + $0x188] sm:$0xff]
        %v1899 = vld [vmem:[%s1848 + $0x190] sm:$0xff]
        %v1900 = vld [vmem:[%s1848 + $0x198] sm:$0xff]
        %v1901 = vld [vmem:[%s1848 + $0x1a0] sm:$0xff]
        %v1902 = vld [vmem:[%s1848 + $0x1a8] sm:$0xff]
        %v1903 = vld [vmem:[%s1848 + $0x1b0] sm:$0xff]
        %v1904 = vld [vmem:[%s1848 + $0x1b8] sm:$0xff]
        %v1905 = vld [vmem:[%s1848 + $0x1c0] sm:$0xff]
        %v1906 = vld [vmem:[%s1848 + $0x1c8] sm:$0xff]
        %v1907 = vld [vmem:[%s1848 + $0x1d0] sm:$0xff]
        %v1908 = vld [vmem:[%s1848 + $0x1d8] sm:$0xff]
        %v1909 = vld [vmem:[%s1848 + $0x1e0] sm:$0xff]
        %v1910 = vld [vmem:[%s1848 + $0x1e8] sm:$0xff]
        %v1911 = vld [vmem:[%s1848 + $0x1f0] sm:$0xff]
        %v1912 = vld [vmem:[%s1848 + $0x1f8] sm:$0xff]
        %v1913 = vld [vmem:[%s1848 + $0x200] sm:$0xff]
        %v1914 = vld [vmem:[%s1848 + $0x208] sm:$0xff]
        %v1915 = vld [vmem:[%s1848 + $0x210] sm:$0xff]
        %v1916 = vld [vmem:[%s1848 + $0x218] sm:$0xff]
        %v1917 = vld [vmem:[%s1848 + $0x220] sm:$0xff]
        %v1918 = vld [vmem:[%s1848 + $0x228] sm:$0xff]
        %v1919 = vld [vmem:[%s1848 + $0x230] sm:$0xff]
        %v1920 = vld [vmem:[%s1848 + $0x238] sm:$0xff]
        %v1921 = vld [vmem:[%s1848 + $0x240] sm:$0xff]
        %v1922 = vld [vmem:[%s1848 + $0x248] sm:$0xff]
        %v1923 = vld [vmem:[%s1848 + $0x250] sm:$0xff]
        %v1924 = vld [vmem:[%s1848 + $0x258] sm:$0xff]
        %v1925 = vld [vmem:[%s1848 + $0x260] sm:$0xff]
        %v1926 = vld [vmem:[%s1848 + $0x268] sm:$0xff]
        %v1927 = vld [vmem:[%s1848 + $0x270] sm:$0xff]
        %v1928 = vld [vmem:[%s1848 + $0x278] sm:$0xff]
        %v1929 = vld [vmem:[%s1848 + $0x280] sm:$0xff]
        %v1930 = vld [vmem:[%s1848 + $0x288] sm:$0xff]
        %v1931 = vld [vmem:[%s1848 + $0x290] sm:$0xff]
        %v1932 = vld [vmem:[%s1848 + $0x298] sm:$0xff]
        %v1933 = vld [vmem:[%s1848 + $0x2a0] sm:$0xff]
        %v1934 = vld [vmem:[%s1848 + $0x2a8] sm:$0xff]
        %v1935 = vld [vmem:[%s1848 + $0x2b0] sm:$0xff]
        %v1936 = vld [vmem:[%s1848 + $0x2b8] sm:$0xff]
        %v1937 = vld [vmem:[%s1848 + $0x2c0] sm:$0xff]
        %v1938 = vld [vmem:[%s1848 + $0x2c8] sm:$0xff]
        %v1939 = vld [vmem:[%s1848 + $0x2d0] sm:$0xff]
        %v1940 = vld [vmem:[%s1848 + $0x2d8] sm:$0xff]
        %v1941 = vld [vmem:[%s1848 + $0x2e0] sm:$0xff]
        %v1942 = vld [vmem:[%s1848 + $0x2e8] sm:$0xff]
        %v1943 = vld [vmem:[%s1848 + $0x2f0] sm:$0xff]
        %v1944 = vld [vmem:[%s1848 + $0x2f8] sm:$0xff]
        %v1945 = vld [vmem:[%s1848 + $0x300] sm:$0xff]
        %v1946 = vld [vmem:[%s1848 + $0x308] sm:$0xff]
        %v1947 = vld [vmem:[%s1848 + $0x310] sm:$0xff]
        %v1948 = vld [vmem:[%s1848 + $0x318] sm:$0xff]
        %v1949 = vld [vmem:[%s1848 + $0x320] sm:$0xff]
        %v1950 = vld [vmem:[%s1848 + $0x328] sm:$0xff]
        %v1951 = vld [vmem:[%s1848 + $0x330] sm:$0xff]
        %v1952 = vld [vmem:[%s1848 + $0x338] sm:$0xff]
        %v1953 = vld [vmem:[%s1848 + $0x340] sm:$0xff]
        %v1954 = vld [vmem:[%s1848 + $0x348] sm:$0xff]
        %v1955 = vld [vmem:[%s1848 + $0x350] sm:$0xff]
        %v1956 = vld [vmem:[%s1848 + $0x358] sm:$0xff]
        %v1957 = vld [vmem:[%s1848 + $0x360] sm:$0xff]
        %v1958 = vld [vmem:[%s1848 + $0x368] sm:$0xff]
        %v1959 = vld [vmem:[%s1848 + $0x370] sm:$0xff]
        %v1960 = vld [vmem:[%s1848 + $0x378] sm:$0xff]
        %v1961 = vld [vmem:[%s1848 + $0x380] sm:$0xff]
        %v1962 = vld [vmem:[%s1848 + $0x388] sm:$0xff]
        %v1963 = vld [vmem:[%s1848 + $0x390] sm:$0xff]
        %v1964 = vld [vmem:[%s1848 + $0x398] sm:$0xff]
        %v1965 = vld [vmem:[%s1848 + $0x3a0] sm:$0xff]
        %v1966 = vld [vmem:[%s1848 + $0x3a8] sm:$0xff]
        %v1967 = vld [vmem:[%s1848 + $0x3b0] sm:$0xff]
        %v1968 = vld [vmem:[%s1848 + $0x3b8] sm:$0xff]
        %v1969 = vld [vmem:[%s1848 + $0x3c0] sm:$0xff]
        %v1970 = vld [vmem:[%s1848 + $0x3c8] sm:$0xff]
        %v1971 = vld [vmem:[%s1848 + $0x3d0] sm:$0xff]
        %v1972 = vld [vmem:[%s1848 + $0x3d8] sm:$0xff]
        %v1973 = vld [vmem:[%s1848 + $0x3e0] sm:$0xff]
        %v1974 = vld [vmem:[%s1848 + $0x3e8] sm:$0xff]
        %v1975 = vld [vmem:[%s1848 + $0x3f0] sm:$0xff]
        %v1976 = vld [vmem:[%s1848 + $0x3f8] sm:$0xff]
        %1977 = vmatprep.subr.mxu0 %v1850
        %1978 = vmatpush1.msra.mxu0 %v1849
        %1979 = vmatprep.subr.mxu0 %v1854
        %1980 = vmatpush1.msra.mxu0 %v1853
        %1981 = vmatprep.subr.mxu0 %v1858
        %1982 = vmatpush1.msra.mxu0 %v1857
        %1983 = vmatprep.subr.mxu0 %v1862
        %1984 = vmatpush1.msra.mxu0 %v1861
        %1985 = vmatprep.subr.mxu0 %v1866
        %1986 = vmatpush1.msra.mxu0 %v1865
        %1987 = vmatprep.subr.mxu0 %v1870
        %1988 = vmatpush1.msra.mxu0 %v1869
        %1989 = vmatprep.subr.mxu0 %v1874
        %1990 = vmatpush1.msra.mxu0 %v1873
        %1991 = vmatprep.subr.mxu0 %v1878
        %1992 = vmatpush1.msra.mxu0 %v1877
        %1993 = vmatprep.subr.mxu0 %v1882
        %1994 = vmatpush1.msra.mxu0 %v1881
        %1995 = vmatprep.subr.mxu0 %v1886
        %1996 = vmatpush1.msra.mxu0 %v1885
        %1997 = vmatprep.subr.mxu0 %v1890
        %1998 = vmatpush1.msra.mxu0 %v1889
        %1999 = vmatprep.subr.mxu0 %v1894
        %2000 = vmatpush1.msra.mxu0 %v1893
        %2001 = vmatprep.subr.mxu0 %v1898
        %2002 = vmatpush1.msra.mxu0 %v1897
        %2003 = vmatprep.subr.mxu0 %v1902
        %2004 = vmatpush1.msra.mxu0 %v1901
        %2005 = vmatprep.subr.mxu0 %v1906
        %2006 = vmatpush1.msra.mxu0 %v1905
        %2007 = vmatprep.subr.mxu0 %v1910
        %2008 = vmatpush1.msra.mxu0 %v1909
        %2009 = vmatprep.subr.mxu0 %v1914
        %2010 = vmatpush1.msra.mxu0 %v1913
        %2011 = vmatprep.subr.mxu0 %v1918
        %2012 = vmatpush1.msra.mxu0 %v1917
        %2013 = vmatprep.subr.mxu0 %v1922
        %2014 = vmatpush1.msra.mxu0 %v1921
        %2015 = vmatprep.subr.mxu0 %v1926
        %2016 = vmatpush1.msra.mxu0 %v1925
        %2017 = vmatprep.subr.mxu0 %v1930
        %2018 = vmatpush1.msra.mxu0 %v1929
        %2019 = vmatprep.subr.mxu0 %v1934
        %2020 = vmatpush1.msra.mxu0 %v1933
        %2021 = vmatprep.subr.mxu0 %v1938
        %2022 = vmatpush1.msra.mxu0 %v1937
        %2023 = vmatprep.subr.mxu0 %v1942
        %2024 = vmatpush1.msra.mxu0 %v1941
        %2025 = vmatprep.subr.mxu0 %v1946
        %2026 = vmatpush1.msra.mxu0 %v1945
        %2027 = vmatprep.subr.mxu0 %v1950
        %2028 = vmatpush1.msra.mxu0 %v1949
        %2029 = vmatprep.subr.mxu0 %v1954
        %2030 = vmatpush1.msra.mxu0 %v1953
        %2031 = vmatprep.subr.mxu0 %v1958
        %2032 = vmatpush1.msra.mxu0 %v1957
        %2033 = vmatprep.subr.mxu0 %v1962
        %2034 = vmatpush1.msra.mxu0 %v1961
        %2035 = vmatprep.subr.mxu0 %v1966
        %2036 = vmatpush1.msra.mxu0 %v1965
        %2037 = vmatprep.subr.mxu0 %v1970
        %2038 = vmatpush1.msra.mxu0 %v1969
        %2039 = vmatprep.subr.mxu0 %v1974
        %2040 = vmatpush1.msra.mxu0 %v1973
        %2041 = vmatprep.mubr.f32.mxu0 %v881
        %2042 = vmatmul.mubr.f32.gmra.mrb[0].mxu0 %v879
        %v2043 = vpop.f32.mrb[0].mxu0
        %v2044 = vadd.f32 0.0, %v2043
        %v2045 = vpop.f32.mrb[0].mxu0
        %v2046 = vadd.f32 0.0, %v2045
        %2047 = vmatprep.mubr.f32.mxu0 %v887
        %2048 = vmatmul.mubr.f32.gmra.mrb[0].mxu0 %v885
        %v2049 = vpop.f32.mrb[0].mxu0
        %v2050 = vadd.f32 0.0, %v2049
        %v2051 = vpop.f32.mrb[0].mxu0
        %v2052 = vadd.f32 0.0, %v2051
        %2053 = vdwg.mxu0
        %2054 = vmatprep.subr.mxu0 %v1852
        %2055 = vmatpush1.msra.mxu0 %v1851
        %2056 = vmatprep.subr.mxu0 %v1856
        %2057 = vmatpush1.msra.mxu0 %v1855
        %2058 = vmatprep.subr.mxu0 %v1860
        %2059 = vmatpush1.msra.mxu0 %v1859
        %2060 = vmatprep.subr.mxu0 %v1864
        %2061 = vmatpush1.msra.mxu0 %v1863
        %2062 = vmatprep.subr.mxu0 %v1868
        %2063 = vmatpush1.msra.mxu0 %v1867
        %2064 = vmatprep.subr.mxu0 %v1872
        %2065 = vmatpush1.msra.mxu0 %v1871
        %2066 = vmatprep.subr.mxu0 %v1876
        %2067 = vmatpush1.msra.mxu0 %v1875
        %2068 = vmatprep.subr.mxu0 %v1880
        %2069 = vmatpush1.msra.mxu0 %v1879
        %2070 = vmatprep.subr.mxu0 %v1884
        %2071 = vmatpush1.msra.mxu0 %v1883
        %2072 = vmatprep.subr.mxu0 %v1888
        %2073 = vmatpush1.msra.mxu0 %v1887
        %2074 = vmatprep.subr.mxu0 %v1892
        %2075 = vmatpush1.msra.mxu0 %v1891
        %2076 = vmatprep.subr.mxu0 %v1896
        %2077 = vmatpush1.msra.mxu0 %v1895
        %2078 = vmatprep.subr.mxu0 %v1900
        %2079 = vmatpush1.msra.mxu0 %v1899
        %2080 = vmatprep.subr.mxu0 %v1904
        %2081 = vmatpush1.msra.mxu0 %v1903
        %2082 = vmatprep.subr.mxu0 %v1908
        %2083 = vmatpush1.msra.mxu0 %v1907
        %2084 = vmatprep.subr.mxu0 %v1912
        %2085 = vmatpush1.msra.mxu0 %v1911
        %2086 = vmatprep.subr.mxu0 %v1916
        %2087 = vmatpush1.msra.mxu0 %v1915
        %2088 = vmatprep.subr.mxu0 %v1920
        %2089 = vmatpush1.msra.mxu0 %v1919
        %2090 = vmatprep.subr.mxu0 %v1924
        %2091 = vmatpush1.msra.mxu0 %v1923
        %2092 = vmatprep.subr.mxu0 %v1928
        %2093 = vmatpush1.msra.mxu0 %v1927
        %2094 = vmatprep.subr.mxu0 %v1932
        %2095 = vmatpush1.msra.mxu0 %v1931
        %2096 = vmatprep.subr.mxu0 %v1936
        %2097 = vmatpush1.msra.mxu0 %v1935
        %2098 = vmatprep.subr.mxu0 %v1940
        %2099 = vmatpush1.msra.mxu0 %v1939
        %2100 = vmatprep.subr.mxu0 %v1944
        %2101 = vmatpush1.msra.mxu0 %v1943
        %2102 = vmatprep.subr.mxu0 %v1948
        %2103 = vmatpush1.msra.mxu0 %v1947
        %2104 = vmatprep.subr.mxu0 %v1952
        %2105 = vmatpush1.msra.mxu0 %v1951
        %2106 = vmatprep.subr.mxu0 %v1956
        %2107 = vmatpush1.msra.mxu0 %v1955
        %2108 = vmatprep.subr.mxu0 %v1960
        %2109 = vmatpush1.msra.mxu0 %v1959
        %2110 = vmatprep.subr.mxu0 %v1964
        %2111 = vmatpush1.msra.mxu0 %v1963
        %2112 = vmatprep.subr.mxu0 %v1968
        %2113 = vmatpush1.msra.mxu0 %v1967
        %2114 = vmatprep.subr.mxu0 %v1972
        %2115 = vmatpush1.msra.mxu0 %v1971
        %2116 = vmatprep.subr.mxu0 %v1976
        %2117 = vmatpush1.msra.mxu0 %v1975
        %2118 = vmatprep.mubr.f32.mxu0 %v881
        %2119 = vmatmul.mubr.f32.gmra.mrb[0].mxu0 %v879
        %v2120 = vpop.f32.mrb[0].mxu0
        %v2121 = vadd.f32 0.0, %v2120
        %v2122 = vpop.f32.mrb[0].mxu0
        %v2123 = vadd.f32 0.0, %v2122
        %2124 = vmatprep.mubr.f32.mxu0 %v887
        %2125 = vmatmul.mubr.f32.gmra.mrb[0].mxu0 %v885
        %v2126 = vpop.f32.mrb[0].mxu0
        %v2127 = vadd.f32 0.0, %v2126
        %v2128 = vpop.f32.mrb[0].mxu0
        %v2129 = vadd.f32 0.0, %v2128
        %2130 = vdwg.mxu0
        %v2131 = vadd.f32 %v1838, %v2121
        %v2132 = vadd.f32 %v1840, %v2123
        %v2133 = vadd.f32 %v1844, %v2127
        %v2134 = vadd.f32 %v1846, %v2129
        %v2135 = vadd.f32 %v2131, %v558
        %v2136 = vadd.f32 %v2132, %v560
        %v2137 = vadd.f32 %v2133, %v564
        %v2138 = vadd.f32 %v2134, %v566
        %v2139 = vxor.u32 %v2135, 2147483648
        %v2140 = vxor.u32 %v2136, 2147483648
        %v2141 = vxor.u32 %v2137, 2147483648
        %v2142 = vxor.u32 %v2138, 2147483648
        %v2143 = vmul.f32 %v2139, 1.442695
        %v2144 = vpow.pop %v2143
        %v2145 = vmul.f32 %v2140, 1.442695
        %v2146 = vpow.pop %v2145
        %v2147 = vmul.f32 %v2141, 1.442695
        %v2148 = vpow.pop %v2147
        %v2149 = vmul.f32 %v2142, 1.442695
        %v2150 = vpow.pop %v2149
        %v2151 = vadd.f32 %v2144, 1.0
        %v2152 = vadd.f32 %v2146, 1.0
        %v2153 = vadd.f32 %v2148, 1.0
        %v2154 = vadd.f32 %v2150, 1.0
        %v2155 = vrcp.pop %v2151
        %v2156 = vmul.f32 1.0, %v2155
        %v2157 = vrcp.pop %v2152
        %v2158 = vmul.f32 1.0, %v2157
        %v2159 = vrcp.pop %v2153
        %v2160 = vmul.f32 1.0, %v2159
        %v2161 = vrcp.pop %v2154
        %v2162 = vmul.f32 1.0, %v2161
        %v2163 = vmul.f32 %v2156, %v1761
        %v2164 = vmul.f32 %v2158, %v1763
        %v2165 = vmul.f32 %v2160, %v1767
        %v2166 = vmul.f32 %v2162, %v1769
        %v2167 = vsub.f32 1.0, %v2156
        %v2168 = vsub.f32 1.0, %v2158
        %v2169 = vsub.f32 1.0, %v2160
        %v2170 = vsub.f32 1.0, %v2162
        %v2171 = vmul.f32 %v2167, %v2044
        %v2172 = vmul.f32 %v2168, %v2046
        %v2173 = vmul.f32 %v2169, %v2050
        %v2174 = vmul.f32 %v2170, %v2052
        %v2175 = vadd.f32 %v2163, %v2171
        %v2176 = vadd.f32 %v2164, %v2172
        %v2177 = vadd.f32 %v2165, %v2173
        %v2178 = vadd.f32 %v2166, %v2174
        %s2179 = scalar_lea.vmem [#allocation11], 512
        %v2180 = vld [vmem:[%s2179] sm:$0xff]
        %v2181 = vld [vmem:[%s2179 + $0x8] sm:$0xff]
        %v2182 = vld [vmem:[%s2179 + $0x10] sm:$0xff]
        %v2183 = vld [vmem:[%s2179 + $0x18] sm:$0xff]
        %v2184 = vld [vmem:[%s2179 + $0x20] sm:$0xff]
        %v2185 = vld [vmem:[%s2179 + $0x28] sm:$0xff]
        %v2186 = vld [vmem:[%s2179 + $0x30] sm:$0xff]
        %v2187 = vld [vmem:[%s2179 + $0x38] sm:$0xff]
        %v2188 = vld [vmem:[%s2179 + $0x40] sm:$0xff]
        %v2189 = vld [vmem:[%s2179 + $0x48] sm:$0xff]
        %v2190 = vld [vmem:[%s2179 + $0x50] sm:$0xff]
        %v2191 = vld [vmem:[%s2179 + $0x58] sm:$0xff]
        %v2192 = vld [vmem:[%s2179 + $0x60] sm:$0xff]
        %v2193 = vld [vmem:[%s2179 + $0x68] sm:$0xff]
        %v2194 = vld [vmem:[%s2179 + $0x70] sm:$0xff]
        %v2195 = vld [vmem:[%s2179 + $0x78] sm:$0xff]
        %v2196 = vld [vmem:[%s2179 + $0x80] sm:$0xff]
        %v2197 = vld [vmem:[%s2179 + $0x88] sm:$0xff]
        %v2198 = vld [vmem:[%s2179 + $0x90] sm:$0xff]
        %v2199 = vld [vmem:[%s2179 + $0x98] sm:$0xff]
        %v2200 = vld [vmem:[%s2179 + $0xa0] sm:$0xff]
        %v2201 = vld [vmem:[%s2179 + $0xa8] sm:$0xff]
        %v2202 = vld [vmem:[%s2179 + $0xb0] sm:$0xff]
        %v2203 = vld [vmem:[%s2179 + $0xb8] sm:$0xff]
        %v2204 = vld [vmem:[%s2179 + $0xc0] sm:$0xff]
        %v2205 = vld [vmem:[%s2179 + $0xc8] sm:$0xff]
        %v2206 = vld [vmem:[%s2179 + $0xd0] sm:$0xff]
        %v2207 = vld [vmem:[%s2179 + $0xd8] sm:$0xff]
        %v2208 = vld [vmem:[%s2179 + $0xe0] sm:$0xff]
        %v2209 = vld [vmem:[%s2179 + $0xe8] sm:$0xff]
        %v2210 = vld [vmem:[%s2179 + $0xf0] sm:$0xff]
        %v2211 = vld [vmem:[%s2179 + $0xf8] sm:$0xff]
        %v2212 = vld [vmem:[%s2179 + $0x100] sm:$0xff]
        %v2213 = vld [vmem:[%s2179 + $0x108] sm:$0xff]
        %v2214 = vld [vmem:[%s2179 + $0x110] sm:$0xff]
        %v2215 = vld [vmem:[%s2179 + $0x118] sm:$0xff]
        %v2216 = vld [vmem:[%s2179 + $0x120] sm:$0xff]
        %v2217 = vld [vmem:[%s2179 + $0x128] sm:$0xff]
        %v2218 = vld [vmem:[%s2179 + $0x130] sm:$0xff]
        %v2219 = vld [vmem:[%s2179 + $0x138] sm:$0xff]
        %v2220 = vld [vmem:[%s2179 + $0x140] sm:$0xff]
        %v2221 = vld [vmem:[%s2179 + $0x148] sm:$0xff]
        %v2222 = vld [vmem:[%s2179 + $0x150] sm:$0xff]
        %v2223 = vld [vmem:[%s2179 + $0x158] sm:$0xff]
        %v2224 = vld [vmem:[%s2179 + $0x160] sm:$0xff]
        %v2225 = vld [vmem:[%s2179 + $0x168] sm:$0xff]
        %v2226 = vld [vmem:[%s2179 + $0x170] sm:$0xff]
        %v2227 = vld [vmem:[%s2179 + $0x178] sm:$0xff]
        %v2228 = vld [vmem:[%s2179 + $0x180] sm:$0xff]
        %v2229 = vld [vmem:[%s2179 + $0x188] sm:$0xff]
        %v2230 = vld [vmem:[%s2179 + $0x190] sm:$0xff]
        %v2231 = vld [vmem:[%s2179 + $0x198] sm:$0xff]
        %v2232 = vld [vmem:[%s2179 + $0x1a0] sm:$0xff]
        %v2233 = vld [vmem:[%s2179 + $0x1a8] sm:$0xff]
        %v2234 = vld [vmem:[%s2179 + $0x1b0] sm:$0xff]
        %v2235 = vld [vmem:[%s2179 + $0x1b8] sm:$0xff]
        %v2236 = vld [vmem:[%s2179 + $0x1c0] sm:$0xff]
        %v2237 = vld [vmem:[%s2179 + $0x1c8] sm:$0xff]
        %v2238 = vld [vmem:[%s2179 + $0x1d0] sm:$0xff]
        %v2239 = vld [vmem:[%s2179 + $0x1d8] sm:$0xff]
        %v2240 = vld [vmem:[%s2179 + $0x1e0] sm:$0xff]
        %v2241 = vld [vmem:[%s2179 + $0x1e8] sm:$0xff]
        %v2242 = vld [vmem:[%s2179 + $0x1f0] sm:$0xff]
        %v2243 = vld [vmem:[%s2179 + $0x1f8] sm:$0xff]
        %2244 = vmatprep.subr.mxu0 %v2181
        %2245 = vmatpush1.msra.mxu0 %v2180
        %2246 = vmatprep.subr.mxu0 %v2183
        %2247 = vmatpush1.msra.mxu0 %v2182
        %2248 = vmatprep.subr.mxu0 %v2185
        %2249 = vmatpush1.msra.mxu0 %v2184
        %2250 = vmatprep.subr.mxu0 %v2187
        %2251 = vmatpush1.msra.mxu0 %v2186
        %2252 = vmatprep.subr.mxu0 %v2189
        %2253 = vmatpush1.msra.mxu0 %v2188
        %2254 = vmatprep.subr.mxu0 %v2191
        %2255 = vmatpush1.msra.mxu0 %v2190
        %2256 = vmatprep.subr.mxu0 %v2193
        %2257 = vmatpush1.msra.mxu0 %v2192
        %2258 = vmatprep.subr.mxu0 %v2195
        %2259 = vmatpush1.msra.mxu0 %v2194
        %2260 = vmatprep.subr.mxu0 %v2197
        %2261 = vmatpush1.msra.mxu0 %v2196
        %2262 = vmatprep.subr.mxu0 %v2199
        %2263 = vmatpush1.msra.mxu0 %v2198
        %2264 = vmatprep.subr.mxu0 %v2201
        %2265 = vmatpush1.msra.mxu0 %v2200
        %2266 = vmatprep.subr.mxu0 %v2203
        %2267 = vmatpush1.msra.mxu0 %v2202
        %2268 = vmatprep.subr.mxu0 %v2205
        %2269 = vmatpush1.msra.mxu0 %v2204
        %2270 = vmatprep.subr.mxu0 %v2207
        %2271 = vmatpush1.msra.mxu0 %v2206
        %2272 = vmatprep.subr.mxu0 %v2209
        %2273 = vmatpush1.msra.mxu0 %v2208
        %2274 = vmatprep.subr.mxu0 %v2211
        %2275 = vmatpush1.msra.mxu0 %v2210
        %2276 = vmatprep.subr.mxu0 %v2213
        %2277 = vmatpush1.msra.mxu0 %v2212
        %2278 = vmatprep.subr.mxu0 %v2215
        %2279 = vmatpush1.msra.mxu0 %v2214
        %2280 = vmatprep.subr.mxu0 %v2217
        %2281 = vmatpush1.msra.mxu0 %v2216
        %2282 = vmatprep.subr.mxu0 %v2219
        %2283 = vmatpush1.msra.mxu0 %v2218
        %2284 = vmatprep.subr.mxu0 %v2221
        %2285 = vmatpush1.msra.mxu0 %v2220
        %2286 = vmatprep.subr.mxu0 %v2223
        %2287 = vmatpush1.msra.mxu0 %v2222
        %2288 = vmatprep.subr.mxu0 %v2225
        %2289 = vmatpush1.msra.mxu0 %v2224
        %2290 = vmatprep.subr.mxu0 %v2227
        %2291 = vmatpush1.msra.mxu0 %v2226
        %2292 = vmatprep.subr.mxu0 %v2229
        %2293 = vmatpush1.msra.mxu0 %v2228
        %2294 = vmatprep.subr.mxu0 %v2231
        %2295 = vmatpush1.msra.mxu0 %v2230
        %2296 = vmatprep.subr.mxu0 %v2233
        %2297 = vmatpush1.msra.mxu0 %v2232
        %2298 = vmatprep.subr.mxu0 %v2235
        %2299 = vmatpush1.msra.mxu0 %v2234
        %2300 = vmatprep.subr.mxu0 %v2237
        %2301 = vmatpush1.msra.mxu0 %v2236
        %2302 = vmatprep.subr.mxu0 %v2239
        %2303 = vmatpush1.msra.mxu0 %v2238
        %2304 = vmatprep.subr.mxu0 %v2241
        %2305 = vmatpush1.msra.mxu0 %v2240
        %2306 = vmatprep.subr.mxu0 %v2243
        %2307 = vmatpush1.msra.mxu0 %v2242
        %2308 = vmatprep.mubr.f32.mxu0 %v2176
        %2309 = vmatmul.mubr.f32.gmra.mrb[0].mxu0 %v2175
        %v2310 = vpop.f32.mrb[0].mxu0
        %v2311 = vadd.f32 0.0, %v2310
        %v2312 = vpop.f32.mrb[0].mxu0
        %v2313 = vadd.f32 0.0, %v2312
        %2314 = vmatprep.mubr.f32.mxu0 %v2178
        %2315 = vmatmul.mubr.f32.gmra.mrb[0].mxu0 %v2177
        %v2316 = vpop.f32.mrb[0].mxu0
        %v2317 = vadd.f32 0.0, %v2316
        %v2318 = vpop.f32.mrb[0].mxu0
        %v2319 = vadd.f32 0.0, %v2318
        %2320 = vdwg.mxu0
        %2321 = vmatprep.subr.mxu0 %v1502
        %2322 = vmatpush1.msra.mxu0 %v1501
        %2323 = vmatprep.subr.mxu0 %v1504
        %2324 = vmatpush1.msra.mxu0 %v1503
        %2325 = vmatprep.subr.mxu0 %v1506
        %2326 = vmatpush1.msra.mxu0 %v1505
        %2327 = vmatprep.subr.mxu0 %v1508
        %2328 = vmatpush1.msra.mxu0 %v1507
        %2329 = vmatprep.subr.mxu0 %v1510
        %2330 = vmatpush1.msra.mxu0 %v1509
        %2331 = vmatprep.subr.mxu0 %v1512
        %2332 = vmatpush1.msra.mxu0 %v1511
        %2333 = vmatprep.subr.mxu0 %v1514
        %2334 = vmatpush1.msra.mxu0 %v1513
        %2335 = vmatprep.subr.mxu0 %v1516
        %2336 = vmatpush1.msra.mxu0 %v1515
        %2337 = vmatprep.subr.mxu0 %v1518
        %2338 = vmatpush1.msra.mxu0 %v1517
        %2339 = vmatprep.subr.mxu0 %v1520
        %2340 = vmatpush1.msra.mxu0 %v1519
        %2341 = vmatprep.subr.mxu0 %v1522
        %2342 = vmatpush1.msra.mxu0 %v1521
        %2343 = vmatprep.subr.mxu0 %v1524
        %2344 = vmatpush1.msra.mxu0 %v1523
        %2345 = vmatprep.subr.mxu0 %v1526
        %2346 = vmatpush1.msra.mxu0 %v1525
        %2347 = vmatprep.subr.mxu0 %v1528
        %2348 = vmatpush1.msra.mxu0 %v1527
        %2349 = vmatprep.subr.mxu0 %v1530
        %2350 = vmatpush1.msra.mxu0 %v1529
        %2351 = vmatprep.subr.mxu0 %v1532
        %2352 = vmatpush1.msra.mxu0 %v1531
        %2353 = vmatprep.subr.mxu0 %v1534
        %2354 = vmatpush1.msra.mxu0 %v1533
        %2355 = vmatprep.subr.mxu0 %v1536
        %2356 = vmatpush1.msra.mxu0 %v1535
        %2357 = vmatprep.subr.mxu0 %v1538
        %2358 = vmatpush1.msra.mxu0 %v1537
        %2359 = vmatprep.subr.mxu0 %v1540
        %2360 = vmatpush1.msra.mxu0 %v1539
        %2361 = vmatprep.subr.mxu0 %v1542
        %2362 = vmatpush1.msra.mxu0 %v1541
        %2363 = vmatprep.subr.mxu0 %v1544
        %2364 = vmatpush1.msra.mxu0 %v1543
        %2365 = vmatprep.subr.mxu0 %v1546
        %2366 = vmatpush1.msra.mxu0 %v1545
        %2367 = vmatprep.subr.mxu0 %v1548
        %2368 = vmatpush1.msra.mxu0 %v1547
        %2369 = vmatprep.subr.mxu0 %v1550
        %2370 = vmatpush1.msra.mxu0 %v1549
        %2371 = vmatprep.subr.mxu0 %v1552
        %2372 = vmatpush1.msra.mxu0 %v1551
        %2373 = vmatprep.subr.mxu0 %v1554
        %2374 = vmatpush1.msra.mxu0 %v1553
        %2375 = vmatprep.subr.mxu0 %v1556
        %2376 = vmatpush1.msra.mxu0 %v1555
        %2377 = vmatprep.subr.mxu0 %v1558
        %2378 = vmatpush1.msra.mxu0 %v1557
        %2379 = vmatprep.subr.mxu0 %v1560
        %2380 = vmatpush1.msra.mxu0 %v1559
        %2381 = vmatprep.subr.mxu0 %v1562
        %2382 = vmatpush1.msra.mxu0 %v1561
        %2383 = vmatprep.subr.mxu0 %v1564
        %2384 = vmatpush1.msra.mxu0 %v1563
        %2385 = vmatprep.mubr.f32.mxu0 %v1498
        %2386 = vmatmul.mubr.f32.gmra.mrb[0].mxu0 %v1497
        %v2387 = vpop.f32.mrb[0].mxu0
        %v2388 = vadd.f32 %v2311, %v2387
        %v2389 = vpop.f32.mrb[0].mxu0
        %v2390 = vadd.f32 %v2313, %v2389
        %2391 = vmatprep.mubr.f32.mxu0 %v1500
        %2392 = vmatmul.mubr.f32.gmra.mrb[0].mxu0 %v1499
        %v2393 = vpop.f32.mrb[0].mxu0
        %v2394 = vadd.f32 %v2317, %v2393
        %v2395 = vpop.f32.mrb[0].mxu0
        %v2396 = vadd.f32 %v2319, %v2395
        %2397 = vdwg.mxu0
        %v2398 = vld [vmem:[%s6] sm:$0x3]
        %v2400 = vlaneseq
        %v2401 = vshrl.u32 %v2400, 7
        %v2402 = vsub.s32 0, %v2401
        %v2403 = vrot.slane %v2398, %v2402
        %v2404 = vlaneseq
        %v2405 = vshrl.u32 %v2404, 7
        %v2406 = vsub.s32 1, %v2405
        %v2407 = vrot.slane %v2398, %v2406
        %v2410 = vadd.f32 %v2388, %v2403
        %v2411 = vadd.f32 %v2390, %v2407
        %v2412 = vadd.f32 %v2394, %v2403
        %v2413 = vadd.f32 %v2396, %v2407
        %2414 = vst [vmem:[%s417] sm:$0xff] %v2410
        %2415 = vst [vmem:[%s417 + $0x8] sm:$0xff] %v2411
        %2416 = vst [vmem:[%s417 + $0x10] sm:$0xff] %v2412
        %2417 = vst [vmem:[%s417 + $0x18] sm:$0xff] %v2413
        %s2418 = sand.u32 %s199, 1
        %s2419 = scalar_lea.sflag [#allocation4], %s2418
        %s2420 = sand.u32 %s199, 1
        %s2421 = smul.addr %s2420, 32
        %s2422 = scalar_lea.vmem [#allocation13], %s2421
        // Predicated region
        $region73: #{tpu_custom_call.1} parent=47 // pred_check
          %p2423 = pneg %p209
        $region74: #{tpu_custom_call.1} parent=47 // pred_check_branch
          %2425 = sbr.rel (%p2423) target = $region76
        $region75: #{tpu_custom_call.1} parent=47 // pred_region
          %s2427 = ssub.s32 512, 512
          %2428 = vsyncadd %s2419, %s2427
          %s2429 = smul.addr %s29, 4
          %s2430 = smul.addr %s2429, 128
          %s2431 = scalar_lea.hbm %s7, %s2430
          %s2432 = sshll.u32 %s2422, 4
          %s2433 = int_to_ptr.vmem [resolvable:$true] %s2432
          %2438 = dma.vmem_to_hbm [thread:$0]  %s2433, 512, %s2431, %s2419, 256, 256, 16
        $region76: #{tpu_custom_call.1} parent=47 // pred_fallthru
          _
      $region48: #{tpu_custom_call.1} parent=5 // pred_fallthru
        _
      %p2439 = scmp.le.s32.totalorder 2, %s24
      // Predicated region
      $region77: #{tpu_custom_call.1} parent=5 // pred_check
        %p2440 = pneg %p2439
      $region78: #{tpu_custom_call.1} parent=5 // pred_check_branch
        %2442 = sbr.rel (%p2440) target = $region80
      $region79: #{tpu_custom_call.1} parent=5 // pred_region
        %s2443 = ssub.s32 %s24, 2
        // Predicated region
        $region81: #{tpu_custom_call.1} parent=79 // pred_check
          %p2444 = pneg %p215
        $region82: #{tpu_custom_call.1} parent=79 // pred_check_branch
          %2446 = sbr.rel (%p2444) target = $region84
        $region83: #{tpu_custom_call.1} parent=79 // pred_region
          %s2447 = sand.u32 %s200, 1
          %s2448 = scalar_lea.sflag [#allocation4], %s2447
          %s2449 = sand.u32 %s200, 1
          %s2450 = smul.addr %s2449, 32
          %s2451 = scalar_lea.vmem [#allocation13], %s2450
          %2452 = dma.done %s2448, 512
        $region84: #{tpu_custom_call.1} parent=79 // pred_fallthru
          _
      $region80: #{tpu_custom_call.1} parent=5 // pred_fallthru
        _
    $region6: #{tpu_custom_call.1} parent=1 // loop_footer
      %s28 = sadd.s32 1, %s24
    $region7: #{tpu_custom_call.1} parent=1 // loop_footer_branch
      %23 = sbr.rel target = $region3
    $region8: #{tpu_custom_call.1} parent=1 // loop_exit
      _
    %2453 = vsyncpa [#allocation3], 1
    %s2454 = scalar_lea.sflag [#allocation3], 1
    %2455 = vsyncpa %s2454, 1
    %2456 = vsyncpa [#allocation6], 1
    %s2457 = scalar_lea.sflag [#allocation6], 1
    %2458 = vsyncpa %s2457, 1
    %2459 = vsyncpa [#allocation9], 1
    %2460 = vsyncpa [#allocation12], 1
    %2461 = vsyncpa [#allocation4], 1
    %s2462 = scalar_lea.sflag [#allocation4], 1
    %2463 = vsyncpa %s2462, 1

</llo_original>
